<compile_context>
chip_gen: v6e
topology: v6e:2x2x1
jax: 0.10.0
libtpu: 0.0.40
codegen_flags: <defaults>
</compile_context>

<pallas_src>
import functools

import jax
import jax.numpy as jnp
from jax.experimental import pallas as pl
from jax.experimental.pallas import tpu as pltpu

_F32 = jnp.float32
_BF16 = jnp.bfloat16
_LANES = 128


def _round_up(x, m):
    return (x + m - 1) // m * m


# ---------------------------------------------------------------------------
# Per-generation tiling / VMEM configuration
# ---------------------------------------------------------------------------
def _tpu_config():
    tm = tn = 256                      # v6e / v7x: feed the 2x256^2 MXU fully
    tk = 512
    vmem_limit = 64 * 1024 * 1024      # v5e / v6e have 128 MiB physical VMEM
    try:
        kind = jax.devices()[0].device_kind.lower()
    except Exception:
        kind = ""
    if "v5 lite" in kind or "v5e" in kind:
        tm = tn = 128                  # v5e MXU is 4x128^2: keep 128 tiles, deep K
    try:
        cap = getattr(pltpu.get_tpu_info(), "vmem_capacity_bytes", None)
        if cap is not None and cap <= 64 * 1024 * 1024:
            vmem_limit = 40 * 1024 * 1024   # v7x: 64 MiB physical, leave headroom
    except Exception:
        pass
    return {"tm": tm, "tn": tn, "tk": tk, "vmem": vmem_limit}


_CFG = _tpu_config()


def _cparams(*sem):
    return pltpu.CompilerParams(dimension_semantics=sem,
                                vmem_limit_bytes=_CFG["vmem"])


def _tile_m(m):
    return min(_CFG["tm"], _round_up(m, 16))


def _k_tiling(k):
    tk = k if k <= _CFG["tk"] else _CFG["tk"]
    return _round_up(k, tk), tk


def _n_tiling(n):
    tn = n if n <= _LANES else min(_CFG["tn"], _round_up(n, _LANES))
    return _round_up(n, tn), tn


def _row_block(rows, max_block=512):
    return min(max_block, _round_up(rows, 16))


def _pad2d(x, rows, cols, dtype=None):
    if dtype is not None and x.dtype != dtype:
        x = x.astype(dtype)
    pr, pc = rows - x.shape[0], cols - x.shape[1]
    if pr or pc:
        x = jnp.pad(x, ((0, pr), (0, pc)))
    return x


def _pad_rows(x, rows):
    pr = rows - x.shape[0]
    return jnp.pad(x, ((0, pr), (0, 0))) if pr else x


# ---------------------------------------------------------------------------
# Generic tiled matmul (f32 accumulator); used for the ee projection + final proj
# ---------------------------------------------------------------------------
def _matmul_kernel(a_ref, b_ref, o_ref, acc_ref):
    @pl.when(pl.program_id(2) == 0)
    def _init():
        acc_ref[...] = jnp.zeros_like(acc_ref)

    acc_ref[...] += jnp.dot(a_ref[...], b_ref[...],
                            preferred_element_type=jnp.float32)

    @pl.when(pl.program_id(2) == pl.num_programs(2) - 1)
    def _store():
        o_ref[...] = acc_ref[...].astype(o_ref.dtype)


def pallas_matmul(a, b, *, compute_dtype=_BF16, out_dtype=_F32):
    m, k = a.shape
    k2, n = b.shape
    assert k == k2
    tm = _tile_m(m)
    mp = _round_up(m, tm)
    kp, tk = _k_tiling(k)
    np_, tn = _n_tiling(n)
    a_p = _pad2d(a, mp, kp, compute_dtype)
    b_p = _pad2d(b, kp, np_, compute_dtype)
    out = pl.pallas_call(
        _matmul_kernel,
        out_shape=jax.ShapeDtypeStruct((mp, np_), out_dtype),
        grid_spec=pltpu.PrefetchScalarGridSpec(
            num_scalar_prefetch=0,
            grid=(mp // tm, np_ // tn, kp // tk),
            in_specs=[pl.BlockSpec((tm, tk), lambda i, j, kk: (i, kk)),
                      pl.BlockSpec((tk, tn), lambda i, j, kk: (kk, j))],
            out_specs=pl.BlockSpec((tm, tn), lambda i, j, kk: (i, j)),
            scratch_shapes=[pltpu.VMEM((tm, tn), jnp.float32)]),
        compiler_params=_cparams("parallel", "parallel", "arbitrary"),
    )(a_p, b_p)
    if (mp, np_) != (m, n):
        out = out[:m, :n]
    return out


# ---------------------------------------------------------------------------
# fc matmul with fused attention-logit epilogue:
#   main = (a @ w)           (bf16, one HBM pass over feat_src)
#   attn = (a @ w) @ proj    (f32, computed from the f32 accumulator)
# ---------------------------------------------------------------------------
def _mm_attn_kernel(a_ref, w_ref, proj_ref, o_ref, attn_ref, acc_ref):
    @pl.when(pl.program_id(1) == 0)
    def _init():
        acc_ref[...] = jnp.zeros_like(acc_ref)

    acc_ref[...] += jnp.dot(a_ref[...], w_ref[...],
                            preferred_element_type=jnp.float32)

    @pl.when(pl.program_id(1) == pl.num_programs(1) - 1)
    def _store():
        acc = acc_ref[...]
        o_ref[...] = acc.astype(o_ref.dtype)
        attn_ref[...] = jnp.dot(acc, proj_ref[...],
                                preferred_element_type=jnp.float32)


def matmul_fc_attn(a, w_p, proj_p):
    m, k = a.shape
    kp, np_ = w_p.shape                # pre-padded weight
    pp = proj_p.shape[1]
    tm = _tile_m(m)
    mp = _round_up(m, tm)
    _, tk = _k_tiling(kp)
    a_p = _pad2d(a, mp, kp, _BF16)
    main, attn = pl.pallas_call(
        _mm_attn_kernel,
        out_shape=(jax.ShapeDtypeStruct((mp, np_), _BF16),
                   jax.ShapeDtypeStruct((mp, pp), _F32)),
        grid_spec=pltpu.PrefetchScalarGridSpec(
            num_scalar_prefetch=0,
            grid=(mp // tm, kp // tk),
            in_specs=[pl.BlockSpec((tm, tk), lambda i, kk: (i, kk)),
                      pl.BlockSpec((tk, np_), lambda i, kk: (kk, 0)),
                      pl.BlockSpec((np_, pp), lambda i, kk: (0, 0))],
            out_specs=(pl.BlockSpec((tm, np_), lambda i, kk: (i, 0)),
                       pl.BlockSpec((tm, pp), lambda i, kk: (i, 0))),
            scratch_shapes=[pltpu.VMEM((tm, np_), jnp.float32)]),
        compiler_params=_cparams("parallel", "arbitrary"),
    )(a_p, w_p, proj_p)
    return main[:m], attn[:m]


# ---------------------------------------------------------------------------
# res_fc matmul with fused finalize epilogue: relu(rst * 1/deg + a @ w)
# ---------------------------------------------------------------------------
def _mm_finalize_kernel(a_ref, w_ref, rst_ref, inv_ref, o_ref, acc_ref):
    @pl.when(pl.program_id(1) == 0)
    def _init():
        acc_ref[...] = jnp.zeros_like(acc_ref)

    acc_ref[...] += jnp.dot(a_ref[...], w_ref[...],
                            preferred_element_type=jnp.float32)

    @pl.when(pl.program_id(1) == pl.num_programs(1) - 1)
    def _store():
        o_ref[...] = jnp.maximum(acc_ref[...] + rst_ref[...] * inv_ref[...], 0.0)


def matmul_res_finalize(a, w_p, rst, inv_deg):
    m, k = a.shape
    kp, np_ = w_p.shape
    tm = _tile_m(m)
    mp = _round_up(m, tm)
    _, tk = _k_tiling(kp)
    a_p = _pad2d(a, mp, kp, _BF16)
    rst_p = _pad2d(rst, mp, np_, _F32)
    inv_p = _pad2d(inv_deg, mp, 1, _F32)
    out = pl.pallas_call(
        _mm_finalize_kernel,
        out_shape=jax.ShapeDtypeStruct((mp, np_), _F32),
        grid_spec=pltpu.PrefetchScalarGridSpec(
            num_scalar_prefetch=0,
            grid=(mp // tm, kp // tk),
            in_specs=[pl.BlockSpec((tm, tk), lambda i, kk: (i, kk)),
                      pl.BlockSpec((tk, np_), lambda i, kk: (kk, 0)),
                      pl.BlockSpec((tm, np_), lambda i, kk: (i, 0)),
                      pl.BlockSpec((tm, 1), lambda i, kk: (i, 0))],
            out_specs=pl.BlockSpec((tm, np_), lambda i, kk: (i, 0)),
            scratch_shapes=[pltpu.VMEM((tm, np_), jnp.float32)]),
        compiler_params=_cparams("parallel", "arbitrary"),
    )(a_p, w_p, rst_p, inv_p)
    return out[:m]


# ---------------------------------------------------------------------------
# Lane-dense per-edge logits: leaky_relu(el[src] + er[dst] + ee)
# (E, H) operands are flattened and repacked to (rows, 128) blocks.
# ---------------------------------------------------------------------------
def _leaky_add3_kernel(a_ref, b_ref, c_ref, o_ref, *, slope):
    s = a_ref[...] + b_ref[...] + c_ref[...]
    o_ref[...] = jnp.where(s > 0, s, slope * s)


def edge_logits(el_g, er_g, ee, *, slope):
    e, h = el_g.shape
    n = e * h
    rows = _round_up(pl.cdiv(n, _LANES), 8)
    br = min(512, rows)
    rows_p = _round_up(rows, br)

    def pack(x):
        flat = x.astype(_F32).reshape(-1)
        return jnp.pad(flat, (0, rows_p * _LANES - n)).reshape(rows_p, _LANES)

    out = pl.pallas_call(
        functools.partial(_leaky_add3_kernel, slope=slope),
        out_shape=jax.ShapeDtypeStruct((rows_p, _LANES), _F32),
        grid_spec=pltpu.PrefetchScalarGridSpec(
            num_scalar_prefetch=0,
            grid=(rows_p // br,),
            in_specs=[pl.BlockSpec((br, _LANES), lambda i: (i, 0))] * 3,
            out_specs=pl.BlockSpec((br, _LANES), lambda i: (i, 0))),
        compiler_params=_cparams("parallel"),
    )(pack(el_g), pack(er_g), pack(ee))
    return out.reshape(-1)[:n].reshape(e, h)


# ---------------------------------------------------------------------------
# Fused per-edge attention weight + message:
#   a[e, h] = (exp(logit - max) / segment_sum) * edge_mask
#   msg[e, h*F:(h+1)*F] = ft_src[e, h*F:(h+1)*F] * a[e, h]
# ft streams in bf16; per-head broadcast is done with VPU ops (no rep matmul).
# ---------------------------------------------------------------------------
def _edge_message_kernel(p_ref, s_ref, mask_ref, ft_ref, o_ref, *, num_heads, f):
    a = (p_ref[...] / jnp.maximum(s_ref[...], 1e-20)) * mask_ref[...]   # (br, H)
    ft = ft_ref[...].astype(jnp.float32)                                # (br, H*F)
    parts = [ft[:, hh * f:(hh + 1) * f] * a[:, hh:hh + 1]
             for hh in range(num_heads)]
    o_ref[...] = jnp.concatenate(parts, axis=1)


def edge_messages(p, s_dst, mask, ft_src, *, num_heads):
    e, h = p.shape
    hf = ft_src.shape[1]
    f = hf // num_heads
    br = _row_block(e)
    ep = _round_up(e, br)
    out = pl.pallas_call(
        functools.partial(_edge_message_kernel, num_heads=num_heads, f=f),
        out_shape=jax.ShapeDtypeStruct((ep, hf), _F32),
        grid_spec=pltpu.PrefetchScalarGridSpec(
            num_scalar_prefetch=0,
            grid=(ep // br,),
            in_specs=[pl.BlockSpec((br, h), lambda i: (i, 0)),
                      pl.BlockSpec((br, h), lambda i: (i, 0)),
                      pl.BlockSpec((br, 1), lambda i: (i, 0)),
                      pl.BlockSpec((br, hf), lambda i: (i, 0))],
            out_specs=pl.BlockSpec((br, hf), lambda i: (i, 0))),
        compiler_params=_cparams("parallel"),
    )(_pad_rows(p.astype(_F32), ep), _pad_rows(s_dst.astype(_F32), ep),
      _pad_rows(mask.astype(_F32), ep), _pad_rows(ft_src, ep))
    return out[:e]


# ---------------------------------------------------------------------------
# Parameter preparation (one-time device layout)
# ---------------------------------------------------------------------------
def _block_diag_attn(attn):
    """(H, F) per-head attention vectors -> block-diagonal (H*F, H) so that
    feat(rows, H*F) @ result == (feat.view(rows, H, F) * attn).sum(-1)."""
    h, f = attn.shape
    eye = jnp.eye(h, dtype=_F32)
    return (attn[:, :, None] * eye[:, None, :]).reshape(h * f, h)


def prepare_params(params):
    """Pre-cast weights to bf16, pre-pad to the tile shapes the fused kernels
    expect, compose fc_edge with attn_edge, and build [attn_l | attn_r]."""
    layers = []
    for lp in params["layers"]:
        in_f, hf = lp["fc_w"].shape
        kp, _ = _k_tiling(in_f)
        np_ = _round_up(hf, _LANES)
        proj_lr = jnp.concatenate([_block_diag_attn(lp["attn_l"]),
                                   _block_diag_attn(lp["attn_r"])], axis=1)
        layers.append(dict(
            fc_w=_pad2d(lp["fc_w"], kp, np_, _BF16),
            res_w=_pad2d(lp["res_w"], kp, np_, _BF16),
            proj_lr=_pad2d(proj_lr, np_, _LANES, _F32),
            # feat_edge is only ever dotted with attn_edge -> compose once (f32)
            w_ee=(lp["fc_edge_w"] @ _block_diag_attn(lp["attn_edge"])).astype(_F32),
        ))
    return dict(layers=layers,
                proj_w=params["proj_w"].astype(_F32),
                proj_b=params["proj_b"].astype(_F32))


# ---------------------------------------------------------------------------
# GATConv layer (eval mode) and myRGAT forward
# ---------------------------------------------------------------------------
def gat_conv_layer(lp, node_h, ee, src, dst, mask, inv_deg, *,
                   n_nodes, num_heads, hf, negative_slope=0.2):
    node_bf = node_h.astype(_BF16)

    # fc matmul + fused f32 attention-logit epilogue (el | er)
    feat_src, eler = matmul_fc_attn(node_bf, lp["fc_w"], lp["proj_lr"])
    el = eler[:, :num_heads]
    er = eler[:, num_heads:2 * num_heads]
    feat_src = feat_src[:, :hf]              # drop lane padding before the gather

    # per-edge leaky-relu logits (gathers el[src]/er[dst] stay in XLA glue)
    logits = edge_logits(el[src], er[dst], ee, slope=negative_slope)     # (E, H)

    # edge_softmax over incoming edges of each destination (edges sorted by dst)
    m = jax.ops.segment_max(logits, dst, num_segments=n_nodes,
                            indices_are_sorted=True)                    # (N, H)
    p = jnp.exp(logits - m[dst])                                        # (E, H)
    s = jax.ops.segment_sum(p, dst, num_segments=n_nodes,
                            indices_are_sorted=True)                    # (N, H)

    if mask is None:
        mask = jnp.ones((src.shape[0], 1), _F32)
    msg = edge_messages(p, s[dst], mask, feat_src[src],
                        num_heads=num_heads)                            # (E, H*F)
    rst = jax.ops.segment_sum(msg, dst, num_segments=n_nodes,
                              indices_are_sorted=True)                  # (N, H*F)

    # res_fc matmul with fused relu(rst * 1/deg + res) epilogue
    nodes_out = matmul_res_finalize(node_bf, lp["res_w"], rst, inv_deg)[:, :hf]
    graph_rst = jnp.sum(nodes_out, axis=0, keepdims=True)               # dgl.sum_nodes
    return graph_rst, nodes_out


def myrgat_forward(params, node_feats, edge_feats, src, dst, edge_mask_prob, *,
                   n_nodes, num_heads, layer_hf):
    # sort edges by destination once so every segment reduction runs sorted
    order = jnp.argsort(dst)
    src = src[order]
    dst = dst[order]
    edge_feats = edge_feats[order]
    mask = (None if edge_mask_prob is None
            else edge_mask_prob[order].reshape(-1, 1).astype(_F32))

    # in-degree normalisation (graph is fixed across layers -> hoisted)
    deg = jax.ops.segment_sum(jnp.ones((src.shape[0],), _F32), dst,
                              num_segments=n_nodes, indices_are_sorted=True)
    inv_deg = (1.0 / jnp.maximum(deg, 1.0)).reshape(-1, 1)

    # dgl.mean_nodes(graph, 'fea') (init_emb) is never used in the reference
    # forward, so it is omitted here.
    embs = []
    h = node_feats
    for lp, hf in zip(params["layers"], layer_hf):
        # ee = (fc_edge(h_edge) * attn_edge).sum(-1): pre-composed skinny f32 matmul
        ee = pallas_matmul(edge_feats, lp["w_ee"], compute_dtype=_F32)
        graph_rst, h = gat_conv_layer(lp, h, ee, src, dst, mask, inv_deg,
                                      n_nodes=n_nodes, num_heads=num_heads, hf=hf)
        embs.append(graph_rst)                       # (1, H*F_layer)
    cat = jnp.concatenate(embs, axis=1)
    return (pallas_matmul(cat, params["proj_w"], compute_dtype=_F32)
            + params["proj_b"][None, :])


# ---------------------------------------------------------------------------
# Parameter init (xavier-normal style; exact init does not affect the demo)
# ---------------------------------------------------------------------------
def _xavier(key, shape, fan_in, fan_out, gain):
    std = gain * (2.0 / (fan_in + fan_out)) ** 0.5
    return std * jax.random.normal(key, shape, dtype=_F32)


def init_gat_layer(key, in_feats, out_feats, edge_feats, num_heads):
    ks = jax.random.split(key, 6)
    hf = num_heads * out_feats
    g = 2.0 ** 0.5  # relu gain
    return dict(
        fc_w=_xavier(ks[0], (in_feats, hf), in_feats, hf, g),
        fc_edge_w=_xavier(ks[1], (edge_feats, hf), edge_feats, hf, g),
        res_w=_xavier(ks[2], (in_feats, hf), in_feats, hf, g),
        attn_l=_xavier(ks[3], (num_heads, out_feats), hf, out_feats, g),
        attn_r=_xavier(ks[4], (num_heads, out_feats), hf, out_feats, g),
        attn_edge=_xavier(ks[5], (num_heads, out_feats), hf, out_feats, g),
    )


def init_myrgat(key, num_kg_layers, in_feats, edge_feats, hid_feats, out_feats,
                num_heads):
    keys = jax.random.split(key, num_kg_layers + 1)
    layers = [init_gat_layer(keys[0], in_feats, hid_feats, edge_feats, num_heads)]
    for i in range(num_kg_layers - 2):
        layers.append(init_gat_layer(keys[i + 1], hid_feats * num_heads, hid_feats,
                                     edge_feats, num_heads))
    if num_kg_layers > 1:
        layers.append(init_gat_layer(keys[num_kg_layers - 1], hid_feats * num_heads,
                                     out_feats, edge_feats, num_heads))
    proj_in = ((num_kg_layers - 2) * hid_feats * num_heads
               + (hid_feats + out_feats) * num_heads)
    kw, _ = jax.random.split(keys[-1])
    return dict(layers=layers,
                proj_w=_xavier(kw, (proj_in, out_feats), proj_in, out_feats, 1.0),
                proj_b=jnp.zeros((out_feats,), _F32))


# ---------------------------------------------------------------------------
# Main: deterministic synthetic graph
# ---------------------------------------------------------------------------
if __name__ == "__main__":
    key = jax.random.PRNGKey(0)
    k_par, k_feat, k_efeat, k_src, k_dst, k_mask = jax.random.split(key, 6)

    n_nodes = 16
    n_edges = 48
    in_feats = 32          # constructor requires in_feats == edge_feas
    edge_feat_dim = 32
    hid_feats = 16
    out_feats = 16
    num_heads = 2
    num_kg_layers = 3

    # graph: guarantee every node has at least one incoming edge
    # (GATConv asserts there are no zero-in-degree nodes)
    dst_fixed = jnp.arange(n_nodes, dtype=jnp.int32)
    dst_rand = jax.random.randint(k_dst, (n_edges - n_nodes,), 0, n_nodes,
                                  dtype=jnp.int32)
    dst = jnp.concatenate([dst_fixed, dst_rand])
    src = jax.random.randint(k_src, (n_edges,), 0, n_nodes, dtype=jnp.int32)

    node_feats = jax.random.normal(k_feat, (n_nodes, in_feats), _F32)
    edge_feats = jax.random.normal(k_efeat, (n_edges, edge_feat_dim), _F32)
    edge_mask_prob = jax.random.uniform(k_mask, (n_edges,), _F32)

    raw_params = init_myrgat(k_par, num_kg_layers, in_feats, edge_feat_dim,
                             hid_feats, out_feats, num_heads)
    params = prepare_params(raw_params)
    layer_hf = tuple([hid_feats * num_heads] * (num_kg_layers - 1)
                     + [out_feats * num_heads])

    fwd = jax.jit(functools.partial(myrgat_forward, n_nodes=n_nodes,
                                    num_heads=num_heads, layer_hf=layer_hf))
    graph_emb = fwd(params, node_feats, edge_feats, src, dst, edge_mask_prob)

    jax.block_until_ready(graph_emb)
    assert graph_emb.shape == (1, out_feats)
    assert bool(jnp.all(jnp.isfinite(graph_emb)))
    print("KERNEL_OK")
</pallas_src>

<mosaic_0001>
module attributes {stable_mosaic.version = 11 : i64} {
  func.func private @main(%arg0: i32) attributes {dimension_semantics = [#tpu.dimension_semantics<core_parallel>], iteration_bounds = array<i64: 2>, tpu.core_type = #tpu.core_type<sc_scalar_subcore>, window_params = []} {
    return
  }
}

module attributes {stable_mosaic.version = 11 : i64} {
  func.func private @main(%arg0: i32) attributes {dimension_semantics = [#tpu.dimension_semantics<core_parallel>], iteration_bounds = array<i64: 2>, tpu.core_type = #tpu.core_type<sc_scalar_subcore>, window_params = []} {
    return
  }
}

module attributes {stable_mosaic.version = 11 : i64} {
  func.func @_mm_attn_kernel(%arg0: i32, %arg1: i32, %arg2: memref<16x32xbf16, #tpu.memory_space<vmem>>, %arg3: memref<32x128xbf16, #tpu.memory_space<vmem>>, %arg4: memref<128x128xf32, #tpu.memory_space<vmem>>, %arg5: memref<16x128xbf16, #tpu.memory_space<vmem>>, %arg6: memref<16x128xf32, #tpu.memory_space<vmem>>, %arg7: memref<16x128xf32, #tpu.memory_space<vmem>>) attributes {dimension_semantics = [#tpu.dimension_semantics<parallel>, #tpu.dimension_semantics<arbitrary>], iteration_bounds = array<i64: 1, 1>, scalar_prefetch = 0 : i64, scratch_operands = 1 : i64, tpu.core_type = #tpu.core_type<tc>, window_params = [{transform_indices = @transform_0, window_bounds = array<i64: 16, 32>}, {transform_indices = @transform_1, window_bounds = array<i64: 32, 128>}, {pipeline_mode = #tpu.pipeline_mode<synchronous>, transform_indices = @transform_2, window_bounds = array<i64: 128, 128>}, {transform_indices = @transform_3, window_bounds = array<i64: 16, 128>}, {transform_indices = @transform_4, window_bounds = array<i64: 16, 128>}]} {
    %c0_i32 = arith.constant 0 : i32
    %0 = arith.cmpi eq, %arg1, %c0_i32 : i32
    %1 = arith.extui %0 : i1 to i32
    %c0_i32_0 = arith.constant 0 : i32
    %2 = arith.cmpi ne, %1, %c0_i32_0 : i32
    scf.if %2 {
      %cst_10 = arith.constant 0.000000e+00 : f32
      %12 = vector.broadcast %cst_10 : f32 to vector<16x128xf32>
      %c0_11 = arith.constant 0 : index
      %c0_12 = arith.constant 0 : index
      %13 = vector.load %arg7[%c0_11, %c0_12] : memref<16x128xf32, #tpu.memory_space<vmem>>, vector<16x128xf32>
      tpu.vector_store %arg7[%c0_11, %c0_12], %12 {strides = array<i32>} : memref<16x128xf32, #tpu.memory_space<vmem>>, vector<16x128xf32>,
    } else {
    }
    %c0 = arith.constant 0 : index
    %c0_1 = arith.constant 0 : index
    %3 = vector.load %arg7[%c0, %c0_1] : memref<16x128xf32, #tpu.memory_space<vmem>>, vector<16x128xf32>
    %c0_2 = arith.constant 0 : index
    %c0_3 = arith.constant 0 : index
    %4 = vector.load %arg2[%c0_2, %c0_3] : memref<16x32xbf16, #tpu.memory_space<vmem>>, vector<16x32xbf16>
    %c0_4 = arith.constant 0 : index
    %c0_5 = arith.constant 0 : index
    %5 = vector.load %arg3[%c0_4, %c0_5] : memref<32x128xbf16, #tpu.memory_space<vmem>>, vector<32x128xbf16>
    %cst = arith.constant dense<0.000000e+00> : vector<16x128xf32>
    %6 = tpu.matmul %4, %5, %cst {dimension_numbers = #tpu.dot_dimension_numbers<[1], [0], [0], [1], [0, 0, 1, 1], [], []>} : vector<16x32xbf16>, vector<32x128xbf16>, vector<16x128xf32> -> vector<16x128xf32>
    %7 = arith.addf %3, %6 : vector<16x128xf32>
    %c0_6 = arith.constant 0 : index
    %c0_7 = arith.constant 0 : index
    %8 = vector.load %arg7[%c0_6, %c0_7] : memref<16x128xf32, #tpu.memory_space<vmem>>, vector<16x128xf32>
    tpu.vector_store %arg7[%c0_6, %c0_7], %7 {strides = array<i32>} : memref<16x128xf32, #tpu.memory_space<vmem>>, vector<16x128xf32>,
    %c0_i32_8 = arith.constant 0 : i32
    %9 = arith.cmpi eq, %arg1, %c0_i32_8 : i32
    %10 = arith.extui %9 : i1 to i32
    %c0_i32_9 = arith.constant 0 : i32
    %11 = arith.cmpi ne, %10, %c0_i32_9 : i32
    scf.if %11 {
      %c0_10 = arith.constant 0 : index
      %c0_11 = arith.constant 0 : index
      %12 = vector.load %arg7[%c0_10, %c0_11] : memref<16x128xf32, #tpu.memory_space<vmem>>, vector<16x128xf32>
      %13 = arith.truncf %12 : vector<16x128xf32> to vector<16x128xbf16>
      %c0_12 = arith.constant 0 : index
      %c0_13 = arith.constant 0 : index
      %14 = vector.load %arg5[%c0_12, %c0_13] : memref<16x128xbf16, #tpu.memory_space<vmem>>, vector<16x128xbf16>
      tpu.vector_store %arg5[%c0_12, %c0_13], %13 {strides = array<i32>} : memref<16x128xbf16, #tpu.memory_space<vmem>>, vector<16x128xbf16>,
      %c0_14 = arith.constant 0 : index
      %c0_15 = arith.constant 0 : index
      %15 = vector.load %arg4[%c0_14, %c0_15] : memref<128x128xf32, #tpu.memory_space<vmem>>, vector<128x128xf32>
      %cst_16 = arith.constant dense<0.000000e+00> : vector<16x128xf32>
      %16 = tpu.matmul %12, %15, %cst_16 {dimension_numbers = #tpu.dot_dimension_numbers<[1], [0], [0], [1], [0, 0, 1, 1], [], []>} : vector<16x128xf32>, vector<128x128xf32>, vector<16x128xf32> -> vector<16x128xf32>
      %c0_17 = arith.constant 0 : index
      %c0_18 = arith.constant 0 : index
      %17 = vector.load %arg6[%c0_17, %c0_18] : memref<16x128xf32, #tpu.memory_space<vmem>>, vector<16x128xf32>
      tpu.vector_store %arg6[%c0_17, %c0_18], %16 {strides = array<i32>} : memref<16x128xf32, #tpu.memory_space<vmem>>, vector<16x128xf32>,
    } else {
    }
    return
  }
  func.func @transform_0(%arg0: i32, %arg1: i32) -> (i32, i32) {
    %c0_i32 = arith.constant 0 : i32
    return %arg0, %arg1 : i32, i32
  }
  func.func @transform_1(%arg0: i32, %arg1: i32) -> (i32, i32) {
    %c0_i32 = arith.constant 0 : i32
    %c0_i32_0 = arith.constant 0 : i32
    return %arg1, %c0_i32 : i32, i32
  }
  func.func @transform_2(%arg0: i32, %arg1: i32) -> (i32, i32) {
    %c0_i32 = arith.constant 0 : i32
    %c0_i32_0 = arith.constant 0 : i32
    %c0_i32_1 = arith.constant 0 : i32
    return %c0_i32, %c0_i32_0 : i32, i32
  }
  func.func @transform_3(%arg0: i32, %arg1: i32) -> (i32, i32) {
    %c0_i32 = arith.constant 0 : i32
    %c0_i32_0 = arith.constant 0 : i32
    return %arg0, %c0_i32 : i32, i32
  }
  func.func @transform_4(%arg0: i32, %arg1: i32) -> (i32, i32) {
    %c0_i32 = arith.constant 0 : i32
    %c0_i32_0 = arith.constant 0 : i32
    return %arg0, %c0_i32 : i32, i32
  }
}

module attributes {stable_mosaic.version = 11 : i64} {
  func.func @_matmul_kernel(%arg0: i32, %arg1: i32, %arg2: i32, %arg3: memref<48x32xf32, #tpu.memory_space<vmem>>, %arg4: memref<32x2xf32, #tpu.memory_space<vmem>>, %arg5: memref<48x2xf32, #tpu.memory_space<vmem>>, %arg6: memref<48x2xf32, #tpu.memory_space<vmem>>) attributes {dimension_semantics = [#tpu.dimension_semantics<parallel>, #tpu.dimension_semantics<parallel>, #tpu.dimension_semantics<arbitrary>], iteration_bounds = array<i64: 1, 1, 1>, scalar_prefetch = 0 : i64, scratch_operands = 1 : i64, tpu.core_type = #tpu.core_type<tc>, window_params = [{transform_indices = @transform_0, window_bounds = array<i64: 48, 32>}, {transform_indices = @transform_1, window_bounds = array<i64: 32, 2>}, {transform_indices = @transform_2, window_bounds = array<i64: 48, 2>}]} {
    %c0_i32 = arith.constant 0 : i32
    %0 = arith.cmpi eq, %arg2, %c0_i32 : i32
    %1 = arith.extui %0 : i1 to i32
    %c0_i32_0 = arith.constant 0 : i32
    %2 = arith.cmpi ne, %1, %c0_i32_0 : i32
    scf.if %2 {
      %cst_10 = arith.constant 0.000000e+00 : f32
      %12 = vector.broadcast %cst_10 : f32 to vector<48x2xf32>
      %c0_11 = arith.constant 0 : index
      %c0_12 = arith.constant 0 : index
      %13 = vector.load %arg6[%c0_11, %c0_12] : memref<48x2xf32, #tpu.memory_space<vmem>>, vector<48x2xf32>
      tpu.vector_store %arg6[%c0_11, %c0_12], %12 {strides = array<i32>} : memref<48x2xf32, #tpu.memory_space<vmem>>, vector<48x2xf32>,
    } else {
    }
    %c0 = arith.constant 0 : index
    %c0_1 = arith.constant 0 : index
    %3 = vector.load %arg6[%c0, %c0_1] : memref<48x2xf32, #tpu.memory_space<vmem>>, vector<48x2xf32>
    %c0_2 = arith.constant 0 : index
    %c0_3 = arith.constant 0 : index
    %4 = vector.load %arg3[%c0_2, %c0_3] : memref<48x32xf32, #tpu.memory_space<vmem>>, vector<48x32xf32>
    %c0_4 = arith.constant 0 : index
    %c0_5 = arith.constant 0 : index
    %5 = vector.load %arg4[%c0_4, %c0_5] : memref<32x2xf32, #tpu.memory_space<vmem>>, vector<32x2xf32>
    %cst = arith.constant dense<0.000000e+00> : vector<48x2xf32>
    %6 = tpu.matmul %4, %5, %cst {dimension_numbers = #tpu.dot_dimension_numbers<[1], [0], [0], [1], [0, 0, 1, 1], [], []>} : vector<48x32xf32>, vector<32x2xf32>, vector<48x2xf32> -> vector<48x2xf32>
    %7 = arith.addf %3, %6 : vector<48x2xf32>
    %c0_6 = arith.constant 0 : index
    %c0_7 = arith.constant 0 : index
    %8 = vector.load %arg6[%c0_6, %c0_7] : memref<48x2xf32, #tpu.memory_space<vmem>>, vector<48x2xf32>
    tpu.vector_store %arg6[%c0_6, %c0_7], %7 {strides = array<i32>} : memref<48x2xf32, #tpu.memory_space<vmem>>, vector<48x2xf32>,
    %c0_i32_8 = arith.constant 0 : i32
    %9 = arith.cmpi eq, %arg2, %c0_i32_8 : i32
    %10 = arith.extui %9 : i1 to i32
    %c0_i32_9 = arith.constant 0 : i32
    %11 = arith.cmpi ne, %10, %c0_i32_9 : i32
    scf.if %11 {
      %c0_10 = arith.constant 0 : index
      %c0_11 = arith.constant 0 : index
      %12 = vector.load %arg6[%c0_10, %c0_11] : memref<48x2xf32, #tpu.memory_space<vmem>>, vector<48x2xf32>
      %c0_12 = arith.constant 0 : index
      %c0_13 = arith.constant 0 : index
      %13 = vector.load %arg5[%c0_12, %c0_13] : memref<48x2xf32, #tpu.memory_space<vmem>>, vector<48x2xf32>
      tpu.vector_store %arg5[%c0_12, %c0_13], %12 {strides = array<i32>} : memref<48x2xf32, #tpu.memory_space<vmem>>, vector<48x2xf32>,
    } else {
    }
    return
  }
  func.func @transform_0(%arg0: i32, %arg1: i32, %arg2: i32) -> (i32, i32) {
    %c0_i32 = arith.constant 0 : i32
    return %arg0, %arg2 : i32, i32
  }
  func.func @transform_1(%arg0: i32, %arg1: i32, %arg2: i32) -> (i32, i32) {
    %c0_i32 = arith.constant 0 : i32
    return %arg2, %arg1 : i32, i32
  }
  func.func @transform_2(%arg0: i32, %arg1: i32, %arg2: i32) -> (i32, i32) {
    %c0_i32 = arith.constant 0 : i32
    return %arg0, %arg1 : i32, i32
  }
}

module attributes {stable_mosaic.version = 11 : i64} {
  func.func @_leaky_add3_kernel(%arg0: i32, %arg1: memref<8x128xf32, #tpu.memory_space<vmem>>, %arg2: memref<8x128xf32, #tpu.memory_space<vmem>>, %arg3: memref<8x128xf32, #tpu.memory_space<vmem>>, %arg4: memref<8x128xf32, #tpu.memory_space<vmem>>) attributes {dimension_semantics = [#tpu.dimension_semantics<parallel>], iteration_bounds = array<i64: 1>, scalar_prefetch = 0 : i64, scratch_operands = 0 : i64, tpu.core_type = #tpu.core_type<tc>, window_params = [{transform_indices = @transform_0, window_bounds = array<i64: 8, 128>}, {transform_indices = @transform_1, window_bounds = array<i64: 8, 128>}, {transform_indices = @transform_2, window_bounds = array<i64: 8, 128>}, {transform_indices = @transform_3, window_bounds = array<i64: 8, 128>}]} {
    %c0 = arith.constant 0 : index
    %c0_0 = arith.constant 0 : index
    %0 = vector.load %arg1[%c0, %c0_0] : memref<8x128xf32, #tpu.memory_space<vmem>>, vector<8x128xf32>
    %c0_1 = arith.constant 0 : index
    %c0_2 = arith.constant 0 : index
    %1 = vector.load %arg2[%c0_1, %c0_2] : memref<8x128xf32, #tpu.memory_space<vmem>>, vector<8x128xf32>
    %2 = arith.addf %0, %1 : vector<8x128xf32>
    %c0_3 = arith.constant 0 : index
    %c0_4 = arith.constant 0 : index
    %3 = vector.load %arg3[%c0_3, %c0_4] : memref<8x128xf32, #tpu.memory_space<vmem>>, vector<8x128xf32>
    %4 = arith.addf %2, %3 : vector<8x128xf32>
    %cst = arith.constant 0.000000e+00 : f32
    %5 = vector.broadcast %cst : f32 to vector<8x128xf32>
    %6 = arith.cmpf ogt, %4, %5 : vector<8x128xf32>
    %cst_5 = arith.constant 2.000000e-01 : f32
    %7 = vector.broadcast %cst_5 : f32 to vector<8x128xf32>
    %8 = arith.mulf %7, %4 : vector<8x128xf32>
    %9 = arith.select %6, %4, %8 : vector<8x128xi1>, vector<8x128xf32>
    %c0_6 = arith.constant 0 : index
    %c0_7 = arith.constant 0 : index
    %10 = vector.load %arg4[%c0_6, %c0_7] : memref<8x128xf32, #tpu.memory_space<vmem>>, vector<8x128xf32>
    tpu.vector_store %arg4[%c0_6, %c0_7], %9 {strides = array<i32>} : memref<8x128xf32, #tpu.memory_space<vmem>>, vector<8x128xf32>,
    return
  }
  func.func @transform_0(%arg0: i32) -> (i32, i32) {
    %c0_i32 = arith.constant 0 : i32
    %c0_i32_0 = arith.constant 0 : i32
    return %arg0, %c0_i32 : i32, i32
  }
  func.func @transform_1(%arg0: i32) -> (i32, i32) {
    %c0_i32 = arith.constant 0 : i32
    %c0_i32_0 = arith.constant 0 : i32
    return %arg0, %c0_i32 : i32, i32
  }
  func.func @transform_2(%arg0: i32) -> (i32, i32) {
    %c0_i32 = arith.constant 0 : i32
    %c0_i32_0 = arith.constant 0 : i32
    return %arg0, %c0_i32 : i32, i32
  }
  func.func @transform_3(%arg0: i32) -> (i32, i32) {
    %c0_i32 = arith.constant 0 : i32
    %c0_i32_0 = arith.constant 0 : i32
    return %arg0, %c0_i32 : i32, i32
  }
}

module attributes {stable_mosaic.version = 11 : i64} {
  func.func @_edge_message_kernel(%arg0: i32, %arg1: memref<48x2xf32, #tpu.memory_space<vmem>>, %arg2: memref<48x2xf32, #tpu.memory_space<vmem>>, %arg3: memref<48x1xf32, #tpu.memory_space<vmem>>, %arg4: memref<48x32xbf16, #tpu.memory_space<vmem>>, %arg5: memref<48x32xf32, #tpu.memory_space<vmem>>) attributes {dimension_semantics = [#tpu.dimension_semantics<parallel>], iteration_bounds = array<i64: 1>, scalar_prefetch = 0 : i64, scratch_operands = 0 : i64, tpu.core_type = #tpu.core_type<tc>, window_params = [{transform_indices = @transform_0, window_bounds = array<i64: 48, 2>}, {transform_indices = @transform_1, window_bounds = array<i64: 48, 2>}, {transform_indices = @transform_2, window_bounds = array<i64: 48, 1>}, {transform_indices = @transform_3, window_bounds = array<i64: 48, 32>}, {transform_indices = @transform_4, window_bounds = array<i64: 48, 32>}]} {
    %c0 = arith.constant 0 : index
    %c0_0 = arith.constant 0 : index
    %0 = vector.load %arg1[%c0, %c0_0] : memref<48x2xf32, #tpu.memory_space<vmem>>, vector<48x2xf32>
    %c0_1 = arith.constant 0 : index
    %c0_2 = arith.constant 0 : index
    %1 = vector.load %arg2[%c0_1, %c0_2] : memref<48x2xf32, #tpu.memory_space<vmem>>, vector<48x2xf32>
    %cst = arith.constant 9.99999968E-21 : f32
    %2 = vector.broadcast %cst : f32 to vector<48x2xf32>
    %3 = arith.maximumf %1, %2 : vector<48x2xf32>
    %4 = arith.divf %0, %3 : vector<48x2xf32>
    %c0_3 = arith.constant 0 : index
    %c0_4 = arith.constant 0 : index
    %5 = vector.load %arg3[%c0_3, %c0_4] : memref<48x1xf32, #tpu.memory_space<vmem>>, vector<48x1xf32>
    %6 = vector.broadcast %5 : vector<48x1xf32> to vector<48x2xf32>
    %7 = arith.mulf %4, %6 : vector<48x2xf32>
    %c0_5 = arith.constant 0 : index
    %c0_6 = arith.constant 0 : index
    %8 = vector.load %arg4[%c0_5, %c0_6] : memref<48x32xbf16, #tpu.memory_space<vmem>>, vector<48x32xbf16>
    %9 = arith.extf %8 : vector<48x32xbf16> to vector<48x32xf32>
    %10 = vector.extract_strided_slice %9 {offsets = [0, 0], sizes = [48, 16], strides = [1, 1]} : vector<48x32xf32> to vector<48x16xf32>
    %11 = vector.extract_strided_slice %7 {offsets = [0, 0], sizes = [48, 1], strides = [1, 1]} : vector<48x2xf32> to vector<48x1xf32>
    %12 = vector.broadcast %11 : vector<48x1xf32> to vector<48x16xf32>
    %13 = arith.mulf %10, %12 : vector<48x16xf32>
    %14 = vector.extract_strided_slice %9 {offsets = [0, 16], sizes = [48, 16], strides = [1, 1]} : vector<48x32xf32> to vector<48x16xf32>
    %15 = vector.extract_strided_slice %7 {offsets = [0, 1], sizes = [48, 1], strides = [1, 1]} : vector<48x2xf32> to vector<48x1xf32>
    %16 = vector.broadcast %15 : vector<48x1xf32> to vector<48x16xf32>
    %17 = arith.mulf %14, %16 : vector<48x16xf32>
    %18 = tpu.concatenate %13, %17 in 1 : vector<48x16xf32>, vector<48x16xf32> -> vector<48x32xf32>
    %c0_7 = arith.constant 0 : index
    %c0_8 = arith.constant 0 : index
    %19 = vector.load %arg5[%c0_7, %c0_8] : memref<48x32xf32, #tpu.memory_space<vmem>>, vector<48x32xf32>
    tpu.vector_store %arg5[%c0_7, %c0_8], %18 {strides = array<i32>} : memref<48x32xf32, #tpu.memory_space<vmem>>, vector<48x32xf32>,
    return
  }
  func.func @transform_0(%arg0: i32) -> (i32, i32) {
    %c0_i32 = arith.constant 0 : i32
    %c0_i32_0 = arith.constant 0 : i32
    return %arg0, %c0_i32 : i32, i32
  }
  func.func @transform_1(%arg0: i32) -> (i32, i32) {
    %c0_i32 = arith.constant 0 : i32
    %c0_i32_0 = arith.constant 0 : i32
    return %arg0, %c0_i32 : i32, i32
  }
  func.func @transform_2(%arg0: i32) -> (i32, i32) {
    %c0_i32 = arith.constant 0 : i32
    %c0_i32_0 = arith.constant 0 : i32
    return %arg0, %c0_i32 : i32, i32
  }
  func.func @transform_3(%arg0: i32) -> (i32, i32) {
    %c0_i32 = arith.constant 0 : i32
    %c0_i32_0 = arith.constant 0 : i32
    return %arg0, %c0_i32 : i32, i32
  }
  func.func @transform_4(%arg0: i32) -> (i32, i32) {
    %c0_i32 = arith.constant 0 : i32
    %c0_i32_0 = arith.constant 0 : i32
    return %arg0, %c0_i32 : i32, i32
  }
}

module attributes {stable_mosaic.version = 11 : i64} {
  func.func @_mm_finalize_kernel(%arg0: i32, %arg1: i32, %arg2: memref<16x32xbf16, #tpu.memory_space<vmem>>, %arg3: memref<32x128xbf16, #tpu.memory_space<vmem>>, %arg4: memref<16x128xf32, #tpu.memory_space<vmem>>, %arg5: memref<16x1xf32, #tpu.memory_space<vmem>>, %arg6: memref<16x128xf32, #tpu.memory_space<vmem>>, %arg7: memref<16x128xf32, #tpu.memory_space<vmem>>) attributes {dimension_semantics = [#tpu.dimension_semantics<parallel>, #tpu.dimension_semantics<arbitrary>], iteration_bounds = array<i64: 1, 1>, scalar_prefetch = 0 : i64, scratch_operands = 1 : i64, tpu.core_type = #tpu.core_type<tc>, window_params = [{transform_indices = @transform_0, window_bounds = array<i64: 16, 32>}, {transform_indices = @transform_1, window_bounds = array<i64: 32, 128>}, {transform_indices = @transform_2, window_bounds = array<i64: 16, 128>}, {transform_indices = @transform_3, window_bounds = array<i64: 16, 1>}, {transform_indices = @transform_4, window_bounds = array<i64: 16, 128>}]} {
    %c0_i32 = arith.constant 0 : i32
    %0 = arith.cmpi eq, %arg1, %c0_i32 : i32
    %1 = arith.extui %0 : i1 to i32
    %c0_i32_0 = arith.constant 0 : i32
    %2 = arith.cmpi ne, %1, %c0_i32_0 : i32
    scf.if %2 {
      %cst_10 = arith.constant 0.000000e+00 : f32
      %12 = vector.broadcast %cst_10 : f32 to vector<16x128xf32>
      %c0_11 = arith.constant 0 : index
      %c0_12 = arith.constant 0 : index
      %13 = vector.load %arg7[%c0_11, %c0_12] : memref<16x128xf32, #tpu.memory_space<vmem>>, vector<16x128xf32>
      tpu.vector_store %arg7[%c0_11, %c0_12], %12 {strides = array<i32>} : memref<16x128xf32, #tpu.memory_space<vmem>>, vector<16x128xf32>,
    } else {
    }
    %c0 = arith.constant 0 : index
    %c0_1 = arith.constant 0 : index
    %3 = vector.load %arg7[%c0, %c0_1] : memref<16x128xf32, #tpu.memory_space<vmem>>, vector<16x128xf32>
    %c0_2 = arith.constant 0 : index
    %c0_3 = arith.constant 0 : index
    %4 = vector.load %arg2[%c0_2, %c0_3] : memref<16x32xbf16, #tpu.memory_space<vmem>>, vector<16x32xbf16>
    %c0_4 = arith.constant 0 : index
    %c0_5 = arith.constant 0 : index
    %5 = vector.load %arg3[%c0_4, %c0_5] : memref<32x128xbf16, #tpu.memory_space<vmem>>, vector<32x128xbf16>
    %cst = arith.constant dense<0.000000e+00> : vector<16x128xf32>
    %6 = tpu.matmul %4, %5, %cst {dimension_numbers = #tpu.dot_dimension_numbers<[1], [0], [0], [1], [0, 0, 1, 1], [], []>} : vector<16x32xbf16>, vector<32x128xbf16>, vector<16x128xf32> -> vector<16x128xf32>
    %7 = arith.addf %3, %6 : vector<16x128xf32>
    %c0_6 = arith.constant 0 : index
    %c0_7 = arith.constant 0 : index
    %8 = vector.load %arg7[%c0_6, %c0_7] : memref<16x128xf32, #tpu.memory_space<vmem>>, vector<16x128xf32>
    tpu.vector_store %arg7[%c0_6, %c0_7], %7 {strides = array<i32>} : memref<16x128xf32, #tpu.memory_space<vmem>>, vector<16x128xf32>,
    %c0_i32_8 = arith.constant 0 : i32
    %9 = arith.cmpi eq, %arg1, %c0_i32_8 : i32
    %10 = arith.extui %9 : i1 to i32
    %c0_i32_9 = arith.constant 0 : i32
    %11 = arith.cmpi ne, %10, %c0_i32_9 : i32
    scf.if %11 {
      %c0_10 = arith.constant 0 : index
      %c0_11 = arith.constant 0 : index
      %12 = vector.load %arg7[%c0_10, %c0_11] : memref<16x128xf32, #tpu.memory_space<vmem>>, vector<16x128xf32>
      %c0_12 = arith.constant 0 : index
      %c0_13 = arith.constant 0 : index
      %13 = vector.load %arg4[%c0_12, %c0_13] : memref<16x128xf32, #tpu.memory_space<vmem>>, vector<16x128xf32>
      %c0_14 = arith.constant 0 : index
      %c0_15 = arith.constant 0 : index
      %14 = vector.load %arg5[%c0_14, %c0_15] : memref<16x1xf32, #tpu.memory_space<vmem>>, vector<16x1xf32>
      %15 = vector.broadcast %14 : vector<16x1xf32> to vector<16x128xf32>
      %16 = arith.mulf %13, %15 : vector<16x128xf32>
      %17 = arith.addf %12, %16 : vector<16x128xf32>
      %cst_16 = arith.constant 0.000000e+00 : f32
      %18 = vector.broadcast %cst_16 : f32 to vector<16x128xf32>
      %19 = arith.maximumf %17, %18 : vector<16x128xf32>
      %c0_17 = arith.constant 0 : index
      %c0_18 = arith.constant 0 : index
      %20 = vector.load %arg6[%c0_17, %c0_18] : memref<16x128xf32, #tpu.memory_space<vmem>>, vector<16x128xf32>
      tpu.vector_store %arg6[%c0_17, %c0_18], %19 {strides = array<i32>} : memref<16x128xf32, #tpu.memory_space<vmem>>, vector<16x128xf32>,
    } else {
    }
    return
  }
  func.func @transform_0(%arg0: i32, %arg1: i32) -> (i32, i32) {
    %c0_i32 = arith.constant 0 : i32
    return %arg0, %arg1 : i32, i32
  }
  func.func @transform_1(%arg0: i32, %arg1: i32) -> (i32, i32) {
    %c0_i32 = arith.constant 0 : i32
    %c0_i32_0 = arith.constant 0 : i32
    return %arg1, %c0_i32 : i32, i32
  }
  func.func @transform_2(%arg0: i32, %arg1: i32) -> (i32, i32) {
    %c0_i32 = arith.constant 0 : i32
    %c0_i32_0 = arith.constant 0 : i32
    return %arg0, %c0_i32 : i32, i32
  }
  func.func @transform_3(%arg0: i32, %arg1: i32) -> (i32, i32) {
    %c0_i32 = arith.constant 0 : i32
    %c0_i32_0 = arith.constant 0 : i32
    return %arg0, %c0_i32 : i32, i32
  }
  func.func @transform_4(%arg0: i32, %arg1: i32) -> (i32, i32) {
    %c0_i32 = arith.constant 0 : i32
    %c0_i32_0 = arith.constant 0 : i32
    return %arg0, %c0_i32 : i32, i32
  }
}

module attributes {stable_mosaic.version = 11 : i64} {
  func.func @_matmul_kernel(%arg0: i32, %arg1: i32, %arg2: i32, %arg3: memref<16x96xf32, #tpu.memory_space<vmem>>, %arg4: memref<96x16xf32, #tpu.memory_space<vmem>>, %arg5: memref<16x16xf32, #tpu.memory_space<vmem>>, %arg6: memref<16x16xf32, #tpu.memory_space<vmem>>) attributes {dimension_semantics = [#tpu.dimension_semantics<parallel>, #tpu.dimension_semantics<parallel>, #tpu.dimension_semantics<arbitrary>], iteration_bounds = array<i64: 1, 1, 1>, scalar_prefetch = 0 : i64, scratch_operands = 1 : i64, tpu.core_type = #tpu.core_type<tc>, window_params = [{transform_indices = @transform_0, window_bounds = array<i64: 16, 96>}, {transform_indices = @transform_1, window_bounds = array<i64: 96, 16>}, {transform_indices = @transform_2, window_bounds = array<i64: 16, 16>}]} {
    %c0_i32 = arith.constant 0 : i32
    %0 = arith.cmpi eq, %arg2, %c0_i32 : i32
    %1 = arith.extui %0 : i1 to i32
    %c0_i32_0 = arith.constant 0 : i32
    %2 = arith.cmpi ne, %1, %c0_i32_0 : i32
    scf.if %2 {
      %cst_10 = arith.constant 0.000000e+00 : f32
      %12 = vector.broadcast %cst_10 : f32 to vector<16x16xf32>
      %c0_11 = arith.constant 0 : index
      %c0_12 = arith.constant 0 : index
      %13 = vector.load %arg6[%c0_11, %c0_12] : memref<16x16xf32, #tpu.memory_space<vmem>>, vector<16x16xf32>
      tpu.vector_store %arg6[%c0_11, %c0_12], %12 {strides = array<i32>} : memref<16x16xf32, #tpu.memory_space<vmem>>, vector<16x16xf32>,
    } else {
    }
    %c0 = arith.constant 0 : index
    %c0_1 = arith.constant 0 : index
    %3 = vector.load %arg6[%c0, %c0_1] : memref<16x16xf32, #tpu.memory_space<vmem>>, vector<16x16xf32>
    %c0_2 = arith.constant 0 : index
    %c0_3 = arith.constant 0 : index
    %4 = vector.load %arg3[%c0_2, %c0_3] : memref<16x96xf32, #tpu.memory_space<vmem>>, vector<16x96xf32>
    %c0_4 = arith.constant 0 : index
    %c0_5 = arith.constant 0 : index
    %5 = vector.load %arg4[%c0_4, %c0_5] : memref<96x16xf32, #tpu.memory_space<vmem>>, vector<96x16xf32>
    %cst = arith.constant dense<0.000000e+00> : vector<16x16xf32>
    %6 = tpu.matmul %4, %5, %cst {dimension_numbers = #tpu.dot_dimension_numbers<[1], [0], [0], [1], [0, 0, 1, 1], [], []>} : vector<16x96xf32>, vector<96x16xf32>, vector<16x16xf32> -> vector<16x16xf32>
    %7 = arith.addf %3, %6 : vector<16x16xf32>
    %c0_6 = arith.constant 0 : index
    %c0_7 = arith.constant 0 : index
    %8 = vector.load %arg6[%c0_6, %c0_7] : memref<16x16xf32, #tpu.memory_space<vmem>>, vector<16x16xf32>
    tpu.vector_store %arg6[%c0_6, %c0_7], %7 {strides = array<i32>} : memref<16x16xf32, #tpu.memory_space<vmem>>, vector<16x16xf32>,
    %c0_i32_8 = arith.constant 0 : i32
    %9 = arith.cmpi eq, %arg2, %c0_i32_8 : i32
    %10 = arith.extui %9 : i1 to i32
    %c0_i32_9 = arith.constant 0 : i32
    %11 = arith.cmpi ne, %10, %c0_i32_9 : i32
    scf.if %11 {
      %c0_10 = arith.constant 0 : index
      %c0_11 = arith.constant 0 : index
      %12 = vector.load %arg6[%c0_10, %c0_11] : memref<16x16xf32, #tpu.memory_space<vmem>>, vector<16x16xf32>
      %c0_12 = arith.constant 0 : index
      %c0_13 = arith.constant 0 : index
      %13 = vector.load %arg5[%c0_12, %c0_13] : memref<16x16xf32, #tpu.memory_space<vmem>>, vector<16x16xf32>
      tpu.vector_store %arg5[%c0_12, %c0_13], %12 {strides = array<i32>} : memref<16x16xf32, #tpu.memory_space<vmem>>, vector<16x16xf32>,
    } else {
    }
    return
  }
  func.func @transform_0(%arg0: i32, %arg1: i32, %arg2: i32) -> (i32, i32) {
    %c0_i32 = arith.constant 0 : i32
    return %arg0, %arg2 : i32, i32
  }
  func.func @transform_1(%arg0: i32, %arg1: i32, %arg2: i32) -> (i32, i32) {
    %c0_i32 = arith.constant 0 : i32
    return %arg2, %arg1 : i32, i32
  }
  func.func @transform_2(%arg0: i32, %arg1: i32, %arg2: i32) -> (i32, i32) {
    %c0_i32 = arith.constant 0 : i32
    return %arg0, %arg1 : i32, i32
  }
}

</mosaic_0001>

<llo_original>
// kernel: myrgat_forward.17
$region0: #{myrgat_forward.17}
  #allocation0 [shape = 'u32[]', space=smem, size = 0x4, offset = 0x4, fixed_abs, tag = 'smem constant byte address 0x4 - core index']
  #allocation1 [shape = 'u32[144,128]{1,0:T(1,128)}', space=vmem, size = 0x12000, scoped, tag = 'internal scratch']
  #allocation2 [shape = 'f32[16,128]{1,0:T(8,128)}', space=vmem, size = 0x2000, scoped, tag = 'scratch operand']
  %s0 = inlined_call_operand.vmem [shape: bf16[16,32], index: 0, kind: input, shape index: {}]
  %s1 = inlined_call_operand.vmem [shape: bf16[32,128], index: 1, kind: input, shape index: {}]
  %s2 = inlined_call_operand.vmem [shape: f32[128,128], index: 2, kind: input, shape index: {}]
  %s3 = inlined_call_operand.vmem [shape: bf16[16,128], index: 3, kind: output, shape index: {0}]
  %s4 = inlined_call_operand.vmem [shape: f32[16,128], index: 4, kind: output, shape index: {1}]
  %5 = xla_tuple %s3, %s4
  %s6 = sld [smem:[#allocation0]]
  $region38: #{myrgat_forward.17} parent=0
    _
  %s8 = ssub.s32 1, %s6
  %s9 = scalar_select 0, %s8, %s6
  // Predicated region
  $region2: #{myrgat_forward.17} parent=0 // pred_check
    _
  $region3: #{myrgat_forward.17} parent=0 // pred_check_branch
    %11 = sbr.rel (0) target = $region5
  $region4: #{myrgat_forward.17} parent=0 // pred_region
    _
  $region5: #{myrgat_forward.17} parent=0 // pred_fallthru
    _
  // Predicated region
  $region6: #{myrgat_forward.17} parent=0 // pred_check
    _
  $region7: #{myrgat_forward.17} parent=0 // pred_check_branch
    %13 = sbr.rel (0) target = $region9
  $region8: #{myrgat_forward.17} parent=0 // pred_region
    _
  $region9: #{myrgat_forward.17} parent=0 // pred_fallthru
    _
  // Predicated region
  $region10: #{myrgat_forward.17} parent=0 // pred_check
    _
  $region11: #{myrgat_forward.17} parent=0 // pred_check_branch
    %15 = sbr.rel (0) target = $region13
  $region12: #{myrgat_forward.17} parent=0 // pred_region
    _
  $region13: #{myrgat_forward.17} parent=0 // pred_fallthru
    _
  %p17 = scmp.eq.s32.totalorder 0, 0
  // Predicated region
  $region14: #{myrgat_forward.17} parent=0 // pred_check
    %p18 = pneg %p17
  $region15: #{myrgat_forward.17} parent=0 // pred_check_branch
    %20 = sbr.rel (%p18) target = $region17
  $region16: #{myrgat_forward.17} parent=0 // pred_region
    %21 = vst [vmem:[#allocation2] sm:$0xff] 0.0
    %22 = vst [vmem:[#allocation2 + $0x8] sm:$0xff] 0.0
  $region17: #{myrgat_forward.17} parent=0 // pred_fallthru
    _
  %v23 = vld [vmem:[#allocation2] sm:$0xff]
  %v24 = vld [vmem:[#allocation2 + $0x8] sm:$0xff]
  %v25 = vld [vmem:[%s0] sm:$0xf]
  %v26 = vld [vmem:[%s0 + $0x4] sm:$0xf]
  %v27 = vld [vmem:[%s1] sm:$0xf]
  %v28 = vld [vmem:[%s1 + $0x4] sm:$0xf]
  %v29 = vld [vmem:[%s1 + $0x8] sm:$0xf]
  %v30 = vld [vmem:[%s1 + $0xc] sm:$0xf]
  %v33 = vunpack.c.l.b16 %v25
  %v34 = vunpack.c.l.b16 %v26
  %v35 = vpack.c.b16 %v34, %v33
  %v40 = vunpack.c.l.b16 %v27
  %v41 = vunpack.c.l.b16 %v28
  %v42 = vunpack.c.l.b16 %v29
  %v43 = vunpack.c.l.b16 %v30
  %v44 = vpack.c.b16 %v41, %v40
  %v45 = vpack.c.b16 %v43, %v42
  %vm48 = vcmask 261120
  %v50 = vsel %vm48, %v35, 0
  %52 = vmatprep.subr.bf16.mxu0 0
  %53 = vmatpush1.bf16.msra.mxu0 0
  %54 = vmatprep.subr.bf16.mxu0 0
  %55 = vmatpush1.bf16.msra.mxu0 0
  %56 = vmatprep.subr.bf16.mxu0 0
  %57 = vmatpush1.bf16.msra.mxu0 0
  %58 = vmatprep.subr.bf16.mxu0 0
  %59 = vmatpush1.bf16.msra.mxu0 0
  %60 = vmatprep.subr.bf16.mxu0 0
  %61 = vmatpush1.bf16.msra.mxu0 0
  %62 = vmatprep.subr.bf16.mxu0 0
  %63 = vmatpush1.bf16.msra.mxu0 0
  %64 = vmatprep.subr.bf16.mxu0 0
  %65 = vmatpush1.bf16.msra.mxu0 %v45
  %66 = vmatprep.subr.bf16.mxu0 0
  %67 = vmatpush1.bf16.msra.mxu0 %v44
  %68 = vmatprep.subr.bf16.mxu0 0
  %69 = vmatpush2.bf16.msra.mxu0 0
  %70 = vmatprep.subr.bf16.mxu0 0
  %71 = vmatpush2.bf16.msra.mxu0 0
  %72 = vmatprep.subr.bf16.mxu0 0
  %73 = vmatpush2.bf16.msra.mxu0 0
  %74 = vmatprep.subr.bf16.mxu0 0
  %75 = vmatpush2.bf16.msra.mxu0 0
  %76 = vmatprep.subr.bf16.mxu0 0
  %77 = vmatpush2.bf16.msra.mxu0 0
  %78 = vmatprep.subr.bf16.mxu0 0
  %79 = vmatpush2.bf16.msra.mxu0 0
  %80 = vmatprep.subr.bf16.mxu0 0
  %81 = vmatpush2.bf16.msra.mxu0 0
  %82 = vmatprep.subr.bf16.mxu0 0
  %83 = vmatpush2.bf16.msra.mxu0 0
  %84 = vmatprep.mubr.bf16.mxu0 0
  %85 = vmatmul.mubr.bf16.gmra.mxu0 %v50
  %v86 = vpop.f32.mrf.mxu0
  %v87 = vadd.f32 0.0, %v86
  %v88 = vpop.f32.mrf.mxu0
  %v89 = vpop.f32.mrf.mxu0
  %v90 = vadd.f32 0.0, %v89
  %v91 = vpop.f32.mrf.mxu0
  %92 = vdwg.mxu0
  %v93 = vadd.f32 %v23, %v87
  %v94 = vadd.f32 %v24, %v90
  %95 = vst [vmem:[#allocation2] sm:$0xff] %v93
  %96 = vst [vmem:[#allocation2 + $0x8] sm:$0xff] %v94
  // Predicated region
  $region18: #{myrgat_forward.17} parent=0 // pred_check
    %p97 = pneg %p17
  $region19: #{myrgat_forward.17} parent=0 // pred_check_branch
    %99 = sbr.rel (%p97) target = $region21
  $region20: #{myrgat_forward.17} parent=0 // pred_region
    %v100 = vld [vmem:[#allocation2] sm:$0xff]
    %v101 = vld [vmem:[#allocation2 + $0x8] sm:$0xff]
    %v102 = vpack.c.bf16 %v101, %v100
    %v104 = vunpack.c.l.b16 %v102
    %v105 = vunpack.c.h.b16 %v102
    %v106 = vpack.c.b16 %v104, %v104
    %v107 = vpack.c.b16 %v105, %v105
    %110 = vst [vmem:[%s3] sm:$0xf] %v106
    %111 = vst [vmem:[%s3 + $0x4] sm:$0xf] %v107
    %v112 = vld [vmem:[%s2] sm:$0xff]
    %v113 = vld [vmem:[%s2 + $0x8] sm:$0xff]
    %v114 = vld [vmem:[%s2 + $0x10] sm:$0xff]
    %v115 = vld [vmem:[%s2 + $0x18] sm:$0xff]
    %v116 = vld [vmem:[%s2 + $0x20] sm:$0xff]
    %v117 = vld [vmem:[%s2 + $0x28] sm:$0xff]
    %v118 = vld [vmem:[%s2 + $0x30] sm:$0xff]
    %v119 = vld [vmem:[%s2 + $0x38] sm:$0xff]
    %v120 = vld [vmem:[%s2 + $0x40] sm:$0xff]
    %v121 = vld [vmem:[%s2 + $0x48] sm:$0xff]
    %v122 = vld [vmem:[%s2 + $0x50] sm:$0xff]
    %v123 = vld [vmem:[%s2 + $0x58] sm:$0xff]
    %v124 = vld [vmem:[%s2 + $0x60] sm:$0xff]
    %v125 = vld [vmem:[%s2 + $0x68] sm:$0xff]
    %v126 = vld [vmem:[%s2 + $0x70] sm:$0xff]
    %v127 = vld [vmem:[%s2 + $0x78] sm:$0xff]
    %128 = vmatprep.subr.mxu0 0.0
    %129 = vmatpush1.msra.mxu0 %v127
    %130 = vmatprep.subr.mxu0 0.0
    %131 = vmatpush1.msra.mxu0 %v126
    %132 = vmatprep.subr.mxu0 0.0
    %133 = vmatpush1.msra.mxu0 %v125
    %134 = vmatprep.subr.mxu0 0.0
    %135 = vmatpush1.msra.mxu0 %v124
    %136 = vmatprep.subr.mxu0 0.0
    %137 = vmatpush1.msra.mxu0 %v123
    %138 = vmatprep.subr.mxu0 0.0
    %139 = vmatpush1.msra.mxu0 %v122
    %140 = vmatprep.subr.mxu0 0.0
    %141 = vmatpush1.msra.mxu0 %v121
    %142 = vmatprep.subr.mxu0 0.0
    %143 = vmatpush1.msra.mxu0 %v120
    %144 = vmatprep.subr.mxu0 0.0
    %145 = vmatpush1.msra.mxu0 %v119
    %146 = vmatprep.subr.mxu0 0.0
    %147 = vmatpush1.msra.mxu0 %v118
    %148 = vmatprep.subr.mxu0 0.0
    %149 = vmatpush1.msra.mxu0 %v117
    %150 = vmatprep.subr.mxu0 0.0
    %151 = vmatpush1.msra.mxu0 %v116
    %152 = vmatprep.subr.mxu0 0.0
    %153 = vmatpush1.msra.mxu0 %v115
    %154 = vmatprep.subr.mxu0 0.0
    %155 = vmatpush1.msra.mxu0 %v114
    %156 = vmatprep.subr.mxu0 0.0
    %157 = vmatpush1.msra.mxu0 %v113
    %158 = vmatprep.subr.mxu0 0.0
    %159 = vmatpush1.msra.mxu0 %v112
    %160 = vmatprep.subr.mxu0 0.0
    %161 = vmatpush2.msra.mxu0 0.0
    %162 = vmatprep.subr.mxu0 0.0
    %163 = vmatpush2.msra.mxu0 0.0
    %164 = vmatprep.subr.mxu0 0.0
    %165 = vmatpush2.msra.mxu0 0.0
    %166 = vmatprep.subr.mxu0 0.0
    %167 = vmatpush2.msra.mxu0 0.0
    %168 = vmatprep.subr.mxu0 0.0
    %169 = vmatpush2.msra.mxu0 0.0
    %170 = vmatprep.subr.mxu0 0.0
    %171 = vmatpush2.msra.mxu0 0.0
    %172 = vmatprep.subr.mxu0 0.0
    %173 = vmatpush2.msra.mxu0 0.0
    %174 = vmatprep.subr.mxu0 0.0
    %175 = vmatpush2.msra.mxu0 0.0
    %176 = vmatprep.subr.mxu0 0.0
    %177 = vmatpush2.msra.mxu0 0.0
    %178 = vmatprep.subr.mxu0 0.0
    %179 = vmatpush2.msra.mxu0 0.0
    %180 = vmatprep.subr.mxu0 0.0
    %181 = vmatpush2.msra.mxu0 0.0
    %182 = vmatprep.subr.mxu0 0.0
    %183 = vmatpush2.msra.mxu0 0.0
    %184 = vmatprep.subr.mxu0 0.0
    %185 = vmatpush2.msra.mxu0 0.0
    %186 = vmatprep.subr.mxu0 0.0
    %187 = vmatpush2.msra.mxu0 0.0
    %188 = vmatprep.subr.mxu0 0.0
    %189 = vmatpush2.msra.mxu0 0.0
    %190 = vmatprep.subr.mxu0 0.0
    %191 = vmatpush2.msra.mxu0 0.0
    %192 = vmatprep.mubr.f32.mxu0 0.0
    %193 = vmatmul.mubr.f32.gmra.mxu0 %v100
    %v194 = vpop.f32.mrf.mxu0
    %v195 = vadd.f32 0.0, %v194
    %v196 = vpop.f32.mrf.mxu0
    %197 = vmatprep.mubr.f32.mxu0 0.0
    %198 = vmatmul.mubr.f32.gmra.mxu0 %v101
    %v199 = vpop.f32.mrf.mxu0
    %v200 = vadd.f32 0.0, %v199
    %v201 = vpop.f32.mrf.mxu0
    %202 = vdwg.mxu0
    %203 = vst [vmem:[%s4] sm:$0xff] %v195
    %204 = vst [vmem:[%s4 + $0x8] sm:$0xff] %v200
  $region21: #{myrgat_forward.17} parent=0 // pred_fallthru
    _
  // Predicated region
  $region22: #{myrgat_forward.17} parent=0 // pred_check
    _
  $region23: #{myrgat_forward.17} parent=0 // pred_check_branch
    %206 = sbr.rel (0) target = $region25
  $region24: #{myrgat_forward.17} parent=0 // pred_region
    _
  $region25: #{myrgat_forward.17} parent=0 // pred_fallthru
    _
  // Predicated region
  $region26: #{myrgat_forward.17} parent=0 // pred_check
    _
  $region27: #{myrgat_forward.17} parent=0 // pred_check_branch
    %208 = sbr.rel (0) target = $region29
  $region28: #{myrgat_forward.17} parent=0 // pred_region
    _
  $region29: #{myrgat_forward.17} parent=0 // pred_fallthru
    _
  // Predicated region
  $region30: #{myrgat_forward.17} parent=0 // pred_check
    _
  $region31: #{myrgat_forward.17} parent=0 // pred_check_branch
    %210 = sbr.rel (0) target = $region33
  $region32: #{myrgat_forward.17} parent=0 // pred_region
    _
  $region33: #{myrgat_forward.17} parent=0 // pred_fallthru
    _
  // Predicated region
  $region34: #{myrgat_forward.17} parent=0 // pred_check
    _
  $region35: #{myrgat_forward.17} parent=0 // pred_check_branch
    %212 = sbr.rel (0) target = $region37
  $region36: #{myrgat_forward.17} parent=0 // pred_region
    _
  $region37: #{myrgat_forward.17} parent=0 // pred_fallthru
    _

// kernel: myrgat_forward.16
$region0: #{myrgat_forward.16}
  #allocation0 [shape = 'u32[]', space=smem, size = 0x4, offset = 0x4, fixed_abs, tag = 'smem constant byte address 0x4 - core index']
  #allocation1 [shape = 'u32[144,128]{1,0:T(1,128)}', space=vmem, size = 0x12000, scoped, tag = 'internal scratch']
  #allocation2 [shape = 'f32[48,2]{1,0:T(8,128)}', space=vmem, size = 0x6000, scoped, tag = 'scratch operand']
  %s0 = inlined_call_operand.vmem [shape: f32[48,32], index: 0, kind: input, shape index: {}]
  %s1 = inlined_call_operand.vmem [shape: f32[32,2], index: 1, kind: input, shape index: {}]
  %s2 = inlined_call_operand.vmem [shape: f32[48,2], index: 2, kind: output, shape index: {}]
  %s3 = sld [smem:[#allocation0]]
  $region26: #{myrgat_forward.16} parent=0
    _
  %s5 = ssub.s32 1, %s3
  %s6 = scalar_select 0, %s5, %s3
  // Predicated region
  $region2: #{myrgat_forward.16} parent=0 // pred_check
    _
  $region3: #{myrgat_forward.16} parent=0 // pred_check_branch
    %8 = sbr.rel (0) target = $region5
  $region4: #{myrgat_forward.16} parent=0 // pred_region
    _
  $region5: #{myrgat_forward.16} parent=0 // pred_fallthru
    _
  // Predicated region
  $region6: #{myrgat_forward.16} parent=0 // pred_check
    _
  $region7: #{myrgat_forward.16} parent=0 // pred_check_branch
    %10 = sbr.rel (0) target = $region9
  $region8: #{myrgat_forward.16} parent=0 // pred_region
    _
  $region9: #{myrgat_forward.16} parent=0 // pred_fallthru
    _
  %p11 = scmp.eq.s32.totalorder 0, 0
  // Predicated region
  $region10: #{myrgat_forward.16} parent=0 // pred_check
    %p12 = pneg %p11
  $region11: #{myrgat_forward.16} parent=0 // pred_check_branch
    %14 = sbr.rel (%p12) target = $region13
  $region12: #{myrgat_forward.16} parent=0 // pred_region
    %vm15 = vcmask 15360
    %16 = vst.msk [vmem:[#allocation2] sm:$0xff] %vm15, 0.0
    %17 = vst.msk [vmem:[#allocation2 + $0x8] sm:$0xff] %vm15, 0.0
    %18 = vst.msk [vmem:[#allocation2 + $0x10] sm:$0xff] %vm15, 0.0
    %19 = vst.msk [vmem:[#allocation2 + $0x18] sm:$0xff] %vm15, 0.0
    %20 = vst.msk [vmem:[#allocation2 + $0x20] sm:$0xff] %vm15, 0.0
    %21 = vst.msk [vmem:[#allocation2 + $0x28] sm:$0xff] %vm15, 0.0
  $region13: #{myrgat_forward.16} parent=0 // pred_fallthru
    _
  %v22 = vld [vmem:[#allocation2] sm:$0xff]
  %v23 = vld [vmem:[#allocation2 + $0x8] sm:$0xff]
  %v24 = vld [vmem:[#allocation2 + $0x10] sm:$0xff]
  %v25 = vld [vmem:[#allocation2 + $0x18] sm:$0xff]
  %v26 = vld [vmem:[#allocation2 + $0x20] sm:$0xff]
  %v27 = vld [vmem:[#allocation2 + $0x28] sm:$0xff]
  %v28 = vld [vmem:[%s0] sm:$0xff]
  %v29 = vld [vmem:[%s0 + $0x8] sm:$0xff]
  %v30 = vld [vmem:[%s0 + $0x10] sm:$0xff]
  %v31 = vld [vmem:[%s0 + $0x18] sm:$0xff]
  %v32 = vld [vmem:[%s0 + $0x20] sm:$0xff]
  %v33 = vld [vmem:[%s0 + $0x28] sm:$0xff]
  %v34 = vld [vmem:[%s1] sm:$0xff]
  %v35 = vld [vmem:[%s1 + $0x8] sm:$0xff]
  %v36 = vld [vmem:[%s1 + $0x10] sm:$0xff]
  %v37 = vld [vmem:[%s1 + $0x18] sm:$0xff]
  %vm38 = vcmask 261120
  %v40 = vsel %vm38, %v28, 0
  %v43 = vsel %vm38, %v29, 0
  %v46 = vsel %vm38, %v30, 0
  %v49 = vsel %vm38, %v31, 0
  %v52 = vsel %vm38, %v32, 0
  %v55 = vsel %vm38, %v33, 0
  %57 = vmatprep.subr.mxu0 0.0
  %58 = vmatpush1.msra.mxu0 0.0
  %59 = vmatprep.subr.mxu0 0.0
  %60 = vmatpush1.msra.mxu0 0.0
  %61 = vmatprep.subr.mxu0 0.0
  %62 = vmatpush1.msra.mxu0 0.0
  %63 = vmatprep.subr.mxu0 0.0
  %64 = vmatpush1.msra.mxu0 0.0
  %65 = vmatprep.subr.mxu0 0.0
  %66 = vmatpush1.msra.mxu0 0.0
  %67 = vmatprep.subr.mxu0 0.0
  %68 = vmatpush1.msra.mxu0 0.0
  %69 = vmatprep.subr.mxu0 0.0
  %70 = vmatpush1.msra.mxu0 0.0
  %71 = vmatprep.subr.mxu0 0.0
  %72 = vmatpush1.msra.mxu0 0.0
  %73 = vmatprep.subr.mxu0 0.0
  %74 = vmatpush1.msra.mxu0 0.0
  %75 = vmatprep.subr.mxu0 0.0
  %76 = vmatpush1.msra.mxu0 0.0
  %77 = vmatprep.subr.mxu0 0.0
  %78 = vmatpush1.msra.mxu0 0.0
  %79 = vmatprep.subr.mxu0 0.0
  %80 = vmatpush1.msra.mxu0 0.0
  %81 = vmatprep.subr.mxu0 0.0
  %82 = vmatpush1.msra.mxu0 %v37
  %83 = vmatprep.subr.mxu0 0.0
  %84 = vmatpush1.msra.mxu0 %v36
  %85 = vmatprep.subr.mxu0 0.0
  %86 = vmatpush1.msra.mxu0 %v35
  %87 = vmatprep.subr.mxu0 0.0
  %88 = vmatpush1.msra.mxu0 %v34
  %89 = vmatprep.subr.mxu0 0.0
  %90 = vmatpush2.msra.mxu0 0.0
  %91 = vmatprep.subr.mxu0 0.0
  %92 = vmatpush2.msra.mxu0 0.0
  %93 = vmatprep.subr.mxu0 0.0
  %94 = vmatpush2.msra.mxu0 0.0
  %95 = vmatprep.subr.mxu0 0.0
  %96 = vmatpush2.msra.mxu0 0.0
  %97 = vmatprep.subr.mxu0 0.0
  %98 = vmatpush2.msra.mxu0 0.0
  %99 = vmatprep.subr.mxu0 0.0
  %100 = vmatpush2.msra.mxu0 0.0
  %101 = vmatprep.subr.mxu0 0.0
  %102 = vmatpush2.msra.mxu0 0.0
  %103 = vmatprep.subr.mxu0 0.0
  %104 = vmatpush2.msra.mxu0 0.0
  %105 = vmatprep.subr.mxu0 0.0
  %106 = vmatpush2.msra.mxu0 0.0
  %107 = vmatprep.subr.mxu0 0.0
  %108 = vmatpush2.msra.mxu0 0.0
  %109 = vmatprep.subr.mxu0 0.0
  %110 = vmatpush2.msra.mxu0 0.0
  %111 = vmatprep.subr.mxu0 0.0
  %112 = vmatpush2.msra.mxu0 0.0
  %113 = vmatprep.subr.mxu0 0.0
  %114 = vmatpush2.msra.mxu0 0.0
  %115 = vmatprep.subr.mxu0 0.0
  %116 = vmatpush2.msra.mxu0 0.0
  %117 = vmatprep.subr.mxu0 0.0
  %118 = vmatpush2.msra.mxu0 0.0
  %119 = vmatprep.subr.mxu0 0.0
  %120 = vmatpush2.msra.mxu0 0.0
  %121 = vmatprep.mubr.f32.mxu0 0.0
  %122 = vmatmul.mubr.f32.gmra.mxu0 %v40
  %v123 = vpop.f32.mrf.mxu0
  %v124 = vadd.f32 0.0, %v123
  %v125 = vpop.f32.mrf.mxu0
  %126 = vmatprep.mubr.f32.mxu0 0.0
  %127 = vmatmul.mubr.f32.gmra.mxu0 %v43
  %v128 = vpop.f32.mrf.mxu0
  %v129 = vadd.f32 0.0, %v128
  %v130 = vpop.f32.mrf.mxu0
  %131 = vmatprep.mubr.f32.mxu0 0.0
  %132 = vmatmul.mubr.f32.gmra.mxu0 %v46
  %v133 = vpop.f32.mrf.mxu0
  %v134 = vadd.f32 0.0, %v133
  %v135 = vpop.f32.mrf.mxu0
  %136 = vmatprep.mubr.f32.mxu0 0.0
  %137 = vmatmul.mubr.f32.gmra.mxu0 %v49
  %v138 = vpop.f32.mrf.mxu0
  %v139 = vadd.f32 0.0, %v138
  %v140 = vpop.f32.mrf.mxu0
  %141 = vmatprep.mubr.f32.mxu0 0.0
  %142 = vmatmul.mubr.f32.gmra.mxu0 %v52
  %v143 = vpop.f32.mrf.mxu0
  %v144 = vadd.f32 0.0, %v143
  %v145 = vpop.f32.mrf.mxu0
  %146 = vmatprep.mubr.f32.mxu0 0.0
  %147 = vmatmul.mubr.f32.gmra.mxu0 %v55
  %v148 = vpop.f32.mrf.mxu0
  %v149 = vadd.f32 0.0, %v148
  %v150 = vpop.f32.mrf.mxu0
  %151 = vdwg.mxu0
  %v152 = vadd.f32 %v22, %v124
  %v153 = vadd.f32 %v23, %v129
  %v154 = vadd.f32 %v24, %v134
  %v155 = vadd.f32 %v25, %v139
  %v156 = vadd.f32 %v26, %v144
  %v157 = vadd.f32 %v27, %v149
  %vm158 = vcmask 15360
  %159 = vst.msk [vmem:[#allocation2] sm:$0xff] %vm158, %v152
  %160 = vst.msk [vmem:[#allocation2 + $0x8] sm:$0xff] %vm158, %v153
  %161 = vst.msk [vmem:[#allocation2 + $0x10] sm:$0xff] %vm158, %v154
  %162 = vst.msk [vmem:[#allocation2 + $0x18] sm:$0xff] %vm158, %v155
  %163 = vst.msk [vmem:[#allocation2 + $0x20] sm:$0xff] %vm158, %v156
  %164 = vst.msk [vmem:[#allocation2 + $0x28] sm:$0xff] %vm158, %v157
  // Predicated region
  $region14: #{myrgat_forward.16} parent=0 // pred_check
    %p165 = pneg %p11
  $region15: #{myrgat_forward.16} parent=0 // pred_check_branch
    %167 = sbr.rel (%p165) target = $region17
  $region16: #{myrgat_forward.16} parent=0 // pred_region
    %v168 = vld [vmem:[#allocation2] sm:$0xff]
    %v169 = vld [vmem:[#allocation2 + $0x8] sm:$0xff]
    %v170 = vld [vmem:[#allocation2 + $0x10] sm:$0xff]
    %v171 = vld [vmem:[#allocation2 + $0x18] sm:$0xff]
    %v172 = vld [vmem:[#allocation2 + $0x20] sm:$0xff]
    %v173 = vld [vmem:[#allocation2 + $0x28] sm:$0xff]
    %174 = vst.msk [vmem:[%s2] sm:$0xff] %vm158, %v168
    %175 = vst.msk [vmem:[%s2 + $0x8] sm:$0xff] %vm158, %v169
    %176 = vst.msk [vmem:[%s2 + $0x10] sm:$0xff] %vm158, %v170
    %177 = vst.msk [vmem:[%s2 + $0x18] sm:$0xff] %vm158, %v171
    %178 = vst.msk [vmem:[%s2 + $0x20] sm:$0xff] %vm158, %v172
    %179 = vst.msk [vmem:[%s2 + $0x28] sm:$0xff] %vm158, %v173
  $region17: #{myrgat_forward.16} parent=0 // pred_fallthru
    _
  // Predicated region
  $region18: #{myrgat_forward.16} parent=0 // pred_check
    _
  $region19: #{myrgat_forward.16} parent=0 // pred_check_branch
    %181 = sbr.rel (0) target = $region21
  $region20: #{myrgat_forward.16} parent=0 // pred_region
    _
  $region21: #{myrgat_forward.16} parent=0 // pred_fallthru
    _
  // Predicated region
  $region22: #{myrgat_forward.16} parent=0 // pred_check
    _
  $region23: #{myrgat_forward.16} parent=0 // pred_check_branch
    %183 = sbr.rel (0) target = $region25
  $region24: #{myrgat_forward.16} parent=0 // pred_region
    _
  $region25: #{myrgat_forward.16} parent=0 // pred_fallthru
    _

// kernel: myrgat_forward.18
$region0: #{myrgat_forward.18}
  #allocation0 [shape = 'u32[]', space=smem, size = 0x4, offset = 0x4, fixed_abs, tag = 'smem constant byte address 0x4 - core index']
  #allocation1 [shape = 'u32[144,128]{1,0:T(1,128)}', space=vmem, size = 0x12000, scoped, tag = 'internal scratch']
  %s0 = inlined_call_operand.vmem [shape: f32[8,128], index: 0, kind: input, shape index: {}]
  %s1 = inlined_call_operand.vmem [shape: f32[8,128], index: 1, kind: input, shape index: {}]
  %s2 = inlined_call_operand.vmem [shape: f32[8,128], index: 2, kind: input, shape index: {}]
  %s3 = inlined_call_operand.vmem [shape: f32[8,128], index: 3, kind: output, shape index: {}]
  %s4 = sld [smem:[#allocation0]]
  $region22: #{myrgat_forward.18} parent=0
    _
  %s6 = ssub.s32 1, %s4
  %s7 = scalar_select 0, %s6, %s4
  // Predicated region
  $region2: #{myrgat_forward.18} parent=0 // pred_check
    _
  $region3: #{myrgat_forward.18} parent=0 // pred_check_branch
    %9 = sbr.rel (0) target = $region5
  $region4: #{myrgat_forward.18} parent=0 // pred_region
    _
  $region5: #{myrgat_forward.18} parent=0 // pred_fallthru
    _
  // Predicated region
  $region6: #{myrgat_forward.18} parent=0 // pred_check
    _
  $region7: #{myrgat_forward.18} parent=0 // pred_check_branch
    %11 = sbr.rel (0) target = $region9
  $region8: #{myrgat_forward.18} parent=0 // pred_region
    _
  $region9: #{myrgat_forward.18} parent=0 // pred_fallthru
    _
  // Predicated region
  $region10: #{myrgat_forward.18} parent=0 // pred_check
    _
  $region11: #{myrgat_forward.18} parent=0 // pred_check_branch
    %13 = sbr.rel (0) target = $region13
  $region12: #{myrgat_forward.18} parent=0 // pred_region
    _
  $region13: #{myrgat_forward.18} parent=0 // pred_fallthru
    _
  %v14 = vld [vmem:[%s0] sm:$0xff]
  %v15 = vld [vmem:[%s1] sm:$0xff]
  %v16 = vadd.f32 %v14, %v15
  %v17 = vld [vmem:[%s2] sm:$0xff]
  %v18 = vadd.f32 %v16, %v17
  %vm19 = vcmp.gt.f32.partialorder %v18, 0.0
  %v20 = vmul.f32 %v18, 0.2
  %v21 = vsel %vm19, %v18, %v20
  %22 = vst [vmem:[%s3] sm:$0xff] %v21
  // Predicated region
  $region14: #{myrgat_forward.18} parent=0 // pred_check
    _
  $region15: #{myrgat_forward.18} parent=0 // pred_check_branch
    %24 = sbr.rel (0) target = $region17
  $region16: #{myrgat_forward.18} parent=0 // pred_region
    _
  $region17: #{myrgat_forward.18} parent=0 // pred_fallthru
    _
  // Predicated region
  $region18: #{myrgat_forward.18} parent=0 // pred_check
    _
  $region19: #{myrgat_forward.18} parent=0 // pred_check_branch
    %26 = sbr.rel (0) target = $region21
  $region20: #{myrgat_forward.18} parent=0 // pred_region
    _
  $region21: #{myrgat_forward.18} parent=0 // pred_fallthru
    _

// kernel: myrgat_forward.19
$region0: #{myrgat_forward.19}
  #allocation0 [shape = 'u32[]', space=smem, size = 0x4, offset = 0x4, fixed_abs, tag = 'smem constant byte address 0x4 - core index']
  #allocation1 [shape = 'u32[144,128]{1,0:T(1,128)}', space=vmem, size = 0x12000, scoped, tag = 'internal scratch']
  %s0 = inlined_call_operand.vmem [shape: f32[48,2], index: 0, kind: input, shape index: {}]
  %s1 = inlined_call_operand.vmem [shape: f32[48,2], index: 1, kind: input, shape index: {}]
  %s2 = inlined_call_operand.vmem [shape: f32[48,1], index: 2, kind: input, shape index: {}]
  %s3 = inlined_call_operand.vmem [shape: bf16[48,32], index: 3, kind: input, shape index: {}]
  %s4 = inlined_call_operand.vmem [shape: f32[48,32], index: 4, kind: output, shape index: {}]
  %s5 = sld [smem:[#allocation0]]
  $region26: #{myrgat_forward.19} parent=0
    _
  %s7 = ssub.s32 1, %s5
  %s8 = scalar_select 0, %s7, %s5
  // Predicated region
  $region2: #{myrgat_forward.19} parent=0 // pred_check
    _
  $region3: #{myrgat_forward.19} parent=0 // pred_check_branch
    %10 = sbr.rel (0) target = $region5
  $region4: #{myrgat_forward.19} parent=0 // pred_region
    _
  $region5: #{myrgat_forward.19} parent=0 // pred_fallthru
    _
  // Predicated region
  $region6: #{myrgat_forward.19} parent=0 // pred_check
    _
  $region7: #{myrgat_forward.19} parent=0 // pred_check_branch
    %12 = sbr.rel (0) target = $region9
  $region8: #{myrgat_forward.19} parent=0 // pred_region
    _
  $region9: #{myrgat_forward.19} parent=0 // pred_fallthru
    _
  // Predicated region
  $region10: #{myrgat_forward.19} parent=0 // pred_check
    _
  $region11: #{myrgat_forward.19} parent=0 // pred_check_branch
    %14 = sbr.rel (0) target = $region13
  $region12: #{myrgat_forward.19} parent=0 // pred_region
    _
  $region13: #{myrgat_forward.19} parent=0 // pred_fallthru
    _
  // Predicated region
  $region14: #{myrgat_forward.19} parent=0 // pred_check
    _
  $region15: #{myrgat_forward.19} parent=0 // pred_check_branch
    %16 = sbr.rel (0) target = $region17
  $region16: #{myrgat_forward.19} parent=0 // pred_region
    _
  $region17: #{myrgat_forward.19} parent=0 // pred_fallthru
    _
  %v17 = vld [vmem:[%s0] sm:$0xff]
  %v18 = vld [vmem:[%s0 + $0x8] sm:$0xff]
  %v19 = vld [vmem:[%s0 + $0x10] sm:$0xff]
  %v20 = vld [vmem:[%s0 + $0x18] sm:$0xff]
  %v21 = vld [vmem:[%s0 + $0x20] sm:$0xff]
  %v22 = vld [vmem:[%s0 + $0x28] sm:$0xff]
  %v23 = vld [vmem:[%s1] sm:$0xff]
  %v24 = vld [vmem:[%s1 + $0x8] sm:$0xff]
  %v25 = vld [vmem:[%s1 + $0x10] sm:$0xff]
  %v26 = vld [vmem:[%s1 + $0x18] sm:$0xff]
  %v27 = vld [vmem:[%s1 + $0x20] sm:$0xff]
  %v28 = vld [vmem:[%s1 + $0x28] sm:$0xff]
  %v29 = vmax.f32 %v23, 1e-20
  %v30 = vmax.f32 %v24, 1e-20
  %v31 = vmax.f32 %v25, 1e-20
  %v32 = vmax.f32 %v26, 1e-20
  %v33 = vmax.f32 %v27, 1e-20
  %v34 = vmax.f32 %v28, 1e-20
  %v35 = vrcp.pop %v29
  %v36 = vmul.f32 %v17, %v35
  %v37 = vrcp.pop %v30
  %v38 = vmul.f32 %v18, %v37
  %v39 = vrcp.pop %v31
  %v40 = vmul.f32 %v19, %v39
  %v41 = vrcp.pop %v32
  %v42 = vmul.f32 %v20, %v41
  %v43 = vrcp.pop %v33
  %v44 = vmul.f32 %v21, %v43
  %v45 = vrcp.pop %v34
  %v46 = vmul.f32 %v22, %v45
  %v47 = vld [vmem:[%s2] sm:$0xff]
  %v48 = vld [vmem:[%s2 + $0x8] sm:$0xff]
  %v49 = vld [vmem:[%s2 + $0x10] sm:$0xff]
  %v50 = vld [vmem:[%s2 + $0x18] sm:$0xff]
  %v51 = vld [vmem:[%s2 + $0x20] sm:$0xff]
  %v52 = vld [vmem:[%s2 + $0x28] sm:$0xff]
  %54 = vset.pattern.permute.xlu0 0
  %55 = vperm.xlu0 %54, %v47
  %v56 = vpop.permute.xlu0 %55
  %59 = vset.pattern.permute.xlu0 0
  %60 = vperm.xlu0 %59, %v48
  %v61 = vpop.permute.xlu0 %60
  %64 = vset.pattern.permute.xlu0 0
  %65 = vperm.xlu0 %64, %v49
  %v66 = vpop.permute.xlu0 %65
  %69 = vset.pattern.permute.xlu0 0
  %70 = vperm.xlu0 %69, %v50
  %v71 = vpop.permute.xlu0 %70
  %74 = vset.pattern.permute.xlu0 0
  %75 = vperm.xlu0 %74, %v51
  %v76 = vpop.permute.xlu0 %75
  %79 = vset.pattern.permute.xlu0 0
  %80 = vperm.xlu0 %79, %v52
  %v81 = vpop.permute.xlu0 %80
  %v83 = vmul.f32 %v36, %v56
  %v84 = vmul.f32 %v38, %v61
  %v85 = vmul.f32 %v40, %v66
  %v86 = vmul.f32 %v42, %v71
  %v87 = vmul.f32 %v44, %v76
  %v88 = vmul.f32 %v46, %v81
  %v89 = vld [vmem:[%s3] sm:$0xf]
  %v90 = vld [vmem:[%s3 + $0x4] sm:$0xf]
  %v91 = vld [vmem:[%s3 + $0x8] sm:$0xf]
  %v92 = vld [vmem:[%s3 + $0xc] sm:$0xf]
  %v93 = vld [vmem:[%s3 + $0x10] sm:$0xf]
  %v94 = vld [vmem:[%s3 + $0x14] sm:$0xf]
  %v95 = vunpack.c.l.bf16 %v89
  %v96 = vunpack.c.l.bf16 %v90
  %v97 = vunpack.c.l.bf16 %v91
  %v98 = vunpack.c.l.bf16 %v92
  %v99 = vunpack.c.l.bf16 %v93
  %v100 = vunpack.c.l.bf16 %v94
  %102 = vset.pattern.permute.xlu0 0
  %103 = vperm.xlu0 %102, %v83
  %v104 = vpop.permute.xlu0 %103
  %107 = vset.pattern.permute.xlu0 0
  %108 = vperm.xlu0 %107, %v84
  %v109 = vpop.permute.xlu0 %108
  %112 = vset.pattern.permute.xlu0 0
  %113 = vperm.xlu0 %112, %v85
  %v114 = vpop.permute.xlu0 %113
  %117 = vset.pattern.permute.xlu0 0
  %118 = vperm.xlu0 %117, %v86
  %v119 = vpop.permute.xlu0 %118
  %122 = vset.pattern.permute.xlu0 0
  %123 = vperm.xlu0 %122, %v87
  %v124 = vpop.permute.xlu0 %123
  %127 = vset.pattern.permute.xlu0 0
  %128 = vperm.xlu0 %127, %v88
  %v129 = vpop.permute.xlu0 %128
  %v131 = vmul.f32 %v95, %v104
  %v132 = vmul.f32 %v96, %v109
  %v133 = vmul.f32 %v97, %v114
  %v134 = vmul.f32 %v98, %v119
  %v135 = vmul.f32 %v99, %v124
  %v136 = vmul.f32 %v100, %v129
  %137 = vset.pattern.permute.xlu0 1
  %138 = vperm.xlu0 %137, %v83
  %v139 = vpop.permute.xlu0 %138
  %141 = vset.pattern.permute.xlu0 1
  %142 = vperm.xlu0 %141, %v84
  %v143 = vpop.permute.xlu0 %142
  %145 = vset.pattern.permute.xlu0 1
  %146 = vperm.xlu0 %145, %v85
  %v147 = vpop.permute.xlu0 %146
  %149 = vset.pattern.permute.xlu0 1
  %150 = vperm.xlu0 %149, %v86
  %v151 = vpop.permute.xlu0 %150
  %153 = vset.pattern.permute.xlu0 1
  %154 = vperm.xlu0 %153, %v87
  %v155 = vpop.permute.xlu0 %154
  %157 = vset.pattern.permute.xlu0 1
  %158 = vperm.xlu0 %157, %v88
  %v159 = vpop.permute.xlu0 %158
  %v161 = vmul.f32 %v95, %v139
  %v162 = vmul.f32 %v96, %v143
  %v163 = vmul.f32 %v97, %v147
  %v164 = vmul.f32 %v98, %v151
  %v165 = vmul.f32 %v99, %v155
  %v166 = vmul.f32 %v100, %v159
  %vm167 = vcmask 130048
  %v168 = vsel %vm167, %v131, %v161
  %v169 = vsel %vm167, %v132, %v162
  %v170 = vsel %vm167, %v133, %v163
  %v171 = vsel %vm167, %v134, %v164
  %v172 = vsel %vm167, %v135, %v165
  %v173 = vsel %vm167, %v136, %v166
  %vm174 = vcmask 261120
  %175 = vst.msk [vmem:[%s4] sm:$0xff] %vm174, %v168
  %176 = vst.msk [vmem:[%s4 + $0x8] sm:$0xff] %vm174, %v169
  %177 = vst.msk [vmem:[%s4 + $0x10] sm:$0xff] %vm174, %v170
  %178 = vst.msk [vmem:[%s4 + $0x18] sm:$0xff] %vm174, %v171
  %179 = vst.msk [vmem:[%s4 + $0x20] sm:$0xff] %vm174, %v172
  %180 = vst.msk [vmem:[%s4 + $0x28] sm:$0xff] %vm174, %v173
  // Predicated region
  $region18: #{myrgat_forward.19} parent=0 // pred_check
    _
  $region19: #{myrgat_forward.19} parent=0 // pred_check_branch
    %182 = sbr.rel (0) target = $region21
  $region20: #{myrgat_forward.19} parent=0 // pred_region
    _
  $region21: #{myrgat_forward.19} parent=0 // pred_fallthru
    _
  // Predicated region
  $region22: #{myrgat_forward.19} parent=0 // pred_check
    _
  $region23: #{myrgat_forward.19} parent=0 // pred_check_branch
    %184 = sbr.rel (0) target = $region25
  $region24: #{myrgat_forward.19} parent=0 // pred_region
    _
  $region25: #{myrgat_forward.19} parent=0 // pred_fallthru
    _

// kernel: myrgat_forward.20
$region0: #{myrgat_forward.20}
  #allocation0 [shape = 'u32[]', space=smem, size = 0x4, offset = 0x4, fixed_abs, tag = 'smem constant byte address 0x4 - core index']
  #allocation1 [shape = 'u32[144,128]{1,0:T(1,128)}', space=vmem, size = 0x12000, scoped, tag = 'internal scratch']
  #allocation2 [shape = 'f32[16,128]{1,0:T(8,128)}', space=vmem, size = 0x2000, scoped, tag = 'scratch operand']
  %s0 = inlined_call_operand.vmem [shape: bf16[16,32], index: 0, kind: input, shape index: {}]
  %s1 = inlined_call_operand.vmem [shape: bf16[32,128], index: 1, kind: input, shape index: {}]
  %s2 = inlined_call_operand.vmem [shape: f32[16,128], index: 2, kind: input, shape index: {}]
  %s3 = inlined_call_operand.vmem [shape: f32[16,1], index: 3, kind: input, shape index: {}]
  %s4 = inlined_call_operand.vmem [shape: f32[16,128], index: 4, kind: output, shape index: {}]
  %s5 = sld [smem:[#allocation0]]
  $region34: #{myrgat_forward.20} parent=0
    _
  %s7 = ssub.s32 1, %s5
  %s8 = scalar_select 0, %s7, %s5
  // Predicated region
  $region2: #{myrgat_forward.20} parent=0 // pred_check
    _
  $region3: #{myrgat_forward.20} parent=0 // pred_check_branch
    %10 = sbr.rel (0) target = $region5
  $region4: #{myrgat_forward.20} parent=0 // pred_region
    _
  $region5: #{myrgat_forward.20} parent=0 // pred_fallthru
    _
  // Predicated region
  $region6: #{myrgat_forward.20} parent=0 // pred_check
    _
  $region7: #{myrgat_forward.20} parent=0 // pred_check_branch
    %12 = sbr.rel (0) target = $region9
  $region8: #{myrgat_forward.20} parent=0 // pred_region
    _
  $region9: #{myrgat_forward.20} parent=0 // pred_fallthru
    _
  // Predicated region
  $region10: #{myrgat_forward.20} parent=0 // pred_check
    _
  $region11: #{myrgat_forward.20} parent=0 // pred_check_branch
    %14 = sbr.rel (0) target = $region13
  $region12: #{myrgat_forward.20} parent=0 // pred_region
    _
  $region13: #{myrgat_forward.20} parent=0 // pred_fallthru
    _
  // Predicated region
  $region14: #{myrgat_forward.20} parent=0 // pred_check
    _
  $region15: #{myrgat_forward.20} parent=0 // pred_check_branch
    %16 = sbr.rel (0) target = $region17
  $region16: #{myrgat_forward.20} parent=0 // pred_region
    _
  $region17: #{myrgat_forward.20} parent=0 // pred_fallthru
    _
  %p18 = scmp.eq.s32.totalorder 0, 0
  // Predicated region
  $region18: #{myrgat_forward.20} parent=0 // pred_check
    %p19 = pneg %p18
  $region19: #{myrgat_forward.20} parent=0 // pred_check_branch
    %21 = sbr.rel (%p19) target = $region21
  $region20: #{myrgat_forward.20} parent=0 // pred_region
    %22 = vst [vmem:[#allocation2] sm:$0xff] 0.0
    %23 = vst [vmem:[#allocation2 + $0x8] sm:$0xff] 0.0
  $region21: #{myrgat_forward.20} parent=0 // pred_fallthru
    _
  %v24 = vld [vmem:[#allocation2] sm:$0xff]
  %v25 = vld [vmem:[#allocation2 + $0x8] sm:$0xff]
  %v26 = vld [vmem:[%s0] sm:$0xf]
  %v27 = vld [vmem:[%s0 + $0x4] sm:$0xf]
  %v28 = vld [vmem:[%s1] sm:$0xf]
  %v29 = vld [vmem:[%s1 + $0x4] sm:$0xf]
  %v30 = vld [vmem:[%s1 + $0x8] sm:$0xf]
  %v31 = vld [vmem:[%s1 + $0xc] sm:$0xf]
  %v34 = vunpack.c.l.b16 %v26
  %v35 = vunpack.c.l.b16 %v27
  %v36 = vpack.c.b16 %v35, %v34
  %v41 = vunpack.c.l.b16 %v28
  %v42 = vunpack.c.l.b16 %v29
  %v43 = vunpack.c.l.b16 %v30
  %v44 = vunpack.c.l.b16 %v31
  %v45 = vpack.c.b16 %v42, %v41
  %v46 = vpack.c.b16 %v44, %v43
  %vm49 = vcmask 261120
  %v51 = vsel %vm49, %v36, 0
  %53 = vmatprep.subr.bf16.mxu0 0
  %54 = vmatpush1.bf16.msra.mxu0 0
  %55 = vmatprep.subr.bf16.mxu0 0
  %56 = vmatpush1.bf16.msra.mxu0 0
  %57 = vmatprep.subr.bf16.mxu0 0
  %58 = vmatpush1.bf16.msra.mxu0 0
  %59 = vmatprep.subr.bf16.mxu0 0
  %60 = vmatpush1.bf16.msra.mxu0 0
  %61 = vmatprep.subr.bf16.mxu0 0
  %62 = vmatpush1.bf16.msra.mxu0 0
  %63 = vmatprep.subr.bf16.mxu0 0
  %64 = vmatpush1.bf16.msra.mxu0 0
  %65 = vmatprep.subr.bf16.mxu0 0
  %66 = vmatpush1.bf16.msra.mxu0 %v46
  %67 = vmatprep.subr.bf16.mxu0 0
  %68 = vmatpush1.bf16.msra.mxu0 %v45
  %69 = vmatprep.subr.bf16.mxu0 0
  %70 = vmatpush2.bf16.msra.mxu0 0
  %71 = vmatprep.subr.bf16.mxu0 0
  %72 = vmatpush2.bf16.msra.mxu0 0
  %73 = vmatprep.subr.bf16.mxu0 0
  %74 = vmatpush2.bf16.msra.mxu0 0
  %75 = vmatprep.subr.bf16.mxu0 0
  %76 = vmatpush2.bf16.msra.mxu0 0
  %77 = vmatprep.subr.bf16.mxu0 0
  %78 = vmatpush2.bf16.msra.mxu0 0
  %79 = vmatprep.subr.bf16.mxu0 0
  %80 = vmatpush2.bf16.msra.mxu0 0
  %81 = vmatprep.subr.bf16.mxu0 0
  %82 = vmatpush2.bf16.msra.mxu0 0
  %83 = vmatprep.subr.bf16.mxu0 0
  %84 = vmatpush2.bf16.msra.mxu0 0
  %85 = vmatprep.mubr.bf16.mxu0 0
  %86 = vmatmul.mubr.bf16.gmra.mxu0 %v51
  %v87 = vpop.f32.mrf.mxu0
  %v88 = vadd.f32 0.0, %v87
  %v89 = vpop.f32.mrf.mxu0
  %v90 = vpop.f32.mrf.mxu0
  %v91 = vadd.f32 0.0, %v90
  %v92 = vpop.f32.mrf.mxu0
  %93 = vdwg.mxu0
  %v94 = vadd.f32 %v24, %v88
  %v95 = vadd.f32 %v25, %v91
  %96 = vst [vmem:[#allocation2] sm:$0xff] %v94
  %97 = vst [vmem:[#allocation2 + $0x8] sm:$0xff] %v95
  // Predicated region
  $region22: #{myrgat_forward.20} parent=0 // pred_check
    %p98 = pneg %p18
  $region23: #{myrgat_forward.20} parent=0 // pred_check_branch
    %100 = sbr.rel (%p98) target = $region25
  $region24: #{myrgat_forward.20} parent=0 // pred_region
    %v101 = vld [vmem:[#allocation2] sm:$0xff]
    %v102 = vld [vmem:[#allocation2 + $0x8] sm:$0xff]
    %v103 = vld [vmem:[%s2] sm:$0xff]
    %v104 = vld [vmem:[%s2 + $0x8] sm:$0xff]
    %v105 = vld [vmem:[%s3] sm:$0xff]
    %v106 = vld [vmem:[%s3 + $0x8] sm:$0xff]
    %108 = vset.pattern.permute.xlu0 0
    %109 = vperm.xlu0 %108, %v105
    %v110 = vpop.permute.xlu0 %109
    %113 = vset.pattern.permute.xlu0 0
    %114 = vperm.xlu0 %113, %v106
    %v115 = vpop.permute.xlu0 %114
    %v117 = vmul.f32 %v103, %v110
    %v118 = vmul.f32 %v104, %v115
    %v119 = vadd.f32 %v101, %v117
    %v120 = vadd.f32 %v102, %v118
    %v121 = vmax.f32 %v119, 0.0
    %v122 = vmax.f32 %v120, 0.0
    %123 = vst [vmem:[%s4] sm:$0xff] %v121
    %124 = vst [vmem:[%s4 + $0x8] sm:$0xff] %v122
  $region25: #{myrgat_forward.20} parent=0 // pred_fallthru
    _
  // Predicated region
  $region26: #{myrgat_forward.20} parent=0 // pred_check
    _
  $region27: #{myrgat_forward.20} parent=0 // pred_check_branch
    %126 = sbr.rel (0) target = $region29
  $region28: #{myrgat_forward.20} parent=0 // pred_region
    _
  $region29: #{myrgat_forward.20} parent=0 // pred_fallthru
    _
  // Predicated region
  $region30: #{myrgat_forward.20} parent=0 // pred_check
    _
  $region31: #{myrgat_forward.20} parent=0 // pred_check_branch
    %128 = sbr.rel (0) target = $region33
  $region32: #{myrgat_forward.20} parent=0 // pred_region
    _
  $region33: #{myrgat_forward.20} parent=0 // pred_fallthru
    _

// kernel: myrgat_forward.31
$region0: #{myrgat_forward.31}
  #allocation0 [shape = 'u32[]', space=smem, size = 0x4, offset = 0x4, fixed_abs, tag = 'smem constant byte address 0x4 - core index']
  #allocation1 [shape = 'u32[144,128]{1,0:T(1,128)}', space=vmem, size = 0x12000, scoped, tag = 'internal scratch']
  #allocation2 [shape = 'f32[16,16]{1,0:T(8,128)}', space=vmem, size = 0x2000, scoped, tag = 'scratch operand']
  %s0 = inlined_call_operand.vmem [shape: f32[16,96], index: 0, kind: input, shape index: {}]
  %s1 = inlined_call_operand.vmem [shape: f32[96,16], index: 1, kind: input, shape index: {}]
  %s2 = inlined_call_operand.vmem [shape: f32[16,16], index: 2, kind: output, shape index: {}]
  %s3 = sld [smem:[#allocation0]]
  $region26: #{myrgat_forward.31} parent=0
    _
  %s5 = ssub.s32 1, %s3
  %s6 = scalar_select 0, %s5, %s3
  // Predicated region
  $region2: #{myrgat_forward.31} parent=0 // pred_check
    _
  $region3: #{myrgat_forward.31} parent=0 // pred_check_branch
    %8 = sbr.rel (0) target = $region5
  $region4: #{myrgat_forward.31} parent=0 // pred_region
    _
  $region5: #{myrgat_forward.31} parent=0 // pred_fallthru
    _
  // Predicated region
  $region6: #{myrgat_forward.31} parent=0 // pred_check
    _
  $region7: #{myrgat_forward.31} parent=0 // pred_check_branch
    %10 = sbr.rel (0) target = $region9
  $region8: #{myrgat_forward.31} parent=0 // pred_region
    _
  $region9: #{myrgat_forward.31} parent=0 // pred_fallthru
    _
  %p11 = scmp.eq.s32.totalorder 0, 0
  // Predicated region
  $region10: #{myrgat_forward.31} parent=0 // pred_check
    %p12 = pneg %p11
  $region11: #{myrgat_forward.31} parent=0 // pred_check_branch
    %14 = sbr.rel (%p12) target = $region13
  $region12: #{myrgat_forward.31} parent=0 // pred_region
    %vm15 = vcmask 130048
    %16 = vst.msk [vmem:[#allocation2] sm:$0xff] %vm15, 0.0
    %17 = vst.msk [vmem:[#allocation2 + $0x8] sm:$0xff] %vm15, 0.0
  $region13: #{myrgat_forward.31} parent=0 // pred_fallthru
    _
  %v18 = vld [vmem:[#allocation2] sm:$0xff]
  %v19 = vld [vmem:[#allocation2 + $0x8] sm:$0xff]
  %v20 = vld [vmem:[%s0] sm:$0xff]
  %v21 = vld [vmem:[%s0 + $0x8] sm:$0xff]
  %v22 = vld [vmem:[%s1] sm:$0xff]
  %v23 = vld [vmem:[%s1 + $0x8] sm:$0xff]
  %v24 = vld [vmem:[%s1 + $0x10] sm:$0xff]
  %v25 = vld [vmem:[%s1 + $0x18] sm:$0xff]
  %v26 = vld [vmem:[%s1 + $0x20] sm:$0xff]
  %v27 = vld [vmem:[%s1 + $0x28] sm:$0xff]
  %v28 = vld [vmem:[%s1 + $0x30] sm:$0xff]
  %v29 = vld [vmem:[%s1 + $0x38] sm:$0xff]
  %v30 = vld [vmem:[%s1 + $0x40] sm:$0xff]
  %v31 = vld [vmem:[%s1 + $0x48] sm:$0xff]
  %v32 = vld [vmem:[%s1 + $0x50] sm:$0xff]
  %v33 = vld [vmem:[%s1 + $0x58] sm:$0xff]
  %vm34 = vcmask 785408
  %v36 = vsel %vm34, %v20, 0
  %v39 = vsel %vm34, %v21, 0
  %41 = vmatprep.subr.mxu0 0.0
  %42 = vmatpush1.msra.mxu0 0.0
  %43 = vmatprep.subr.mxu0 0.0
  %44 = vmatpush1.msra.mxu0 0.0
  %45 = vmatprep.subr.mxu0 0.0
  %46 = vmatpush1.msra.mxu0 0.0
  %47 = vmatprep.subr.mxu0 0.0
  %48 = vmatpush1.msra.mxu0 0.0
  %49 = vmatprep.subr.mxu0 0.0
  %50 = vmatpush1.msra.mxu0 %v33
  %51 = vmatprep.subr.mxu0 0.0
  %52 = vmatpush1.msra.mxu0 %v32
  %53 = vmatprep.subr.mxu0 0.0
  %54 = vmatpush1.msra.mxu0 %v31
  %55 = vmatprep.subr.mxu0 0.0
  %56 = vmatpush1.msra.mxu0 %v30
  %57 = vmatprep.subr.mxu0 0.0
  %58 = vmatpush1.msra.mxu0 %v29
  %59 = vmatprep.subr.mxu0 0.0
  %60 = vmatpush1.msra.mxu0 %v28
  %61 = vmatprep.subr.mxu0 0.0
  %62 = vmatpush1.msra.mxu0 %v27
  %63 = vmatprep.subr.mxu0 0.0
  %64 = vmatpush1.msra.mxu0 %v26
  %65 = vmatprep.subr.mxu0 0.0
  %66 = vmatpush1.msra.mxu0 %v25
  %67 = vmatprep.subr.mxu0 0.0
  %68 = vmatpush1.msra.mxu0 %v24
  %69 = vmatprep.subr.mxu0 0.0
  %70 = vmatpush1.msra.mxu0 %v23
  %71 = vmatprep.subr.mxu0 0.0
  %72 = vmatpush1.msra.mxu0 %v22
  %73 = vmatprep.subr.mxu0 0.0
  %74 = vmatpush2.msra.mxu0 0.0
  %75 = vmatprep.subr.mxu0 0.0
  %76 = vmatpush2.msra.mxu0 0.0
  %77 = vmatprep.subr.mxu0 0.0
  %78 = vmatpush2.msra.mxu0 0.0
  %79 = vmatprep.subr.mxu0 0.0
  %80 = vmatpush2.msra.mxu0 0.0
  %81 = vmatprep.subr.mxu0 0.0
  %82 = vmatpush2.msra.mxu0 0.0
  %83 = vmatprep.subr.mxu0 0.0
  %84 = vmatpush2.msra.mxu0 0.0
  %85 = vmatprep.subr.mxu0 0.0
  %86 = vmatpush2.msra.mxu0 0.0
  %87 = vmatprep.subr.mxu0 0.0
  %88 = vmatpush2.msra.mxu0 0.0
  %89 = vmatprep.subr.mxu0 0.0
  %90 = vmatpush2.msra.mxu0 0.0
  %91 = vmatprep.subr.mxu0 0.0
  %92 = vmatpush2.msra.mxu0 0.0
  %93 = vmatprep.subr.mxu0 0.0
  %94 = vmatpush2.msra.mxu0 0.0
  %95 = vmatprep.subr.mxu0 0.0
  %96 = vmatpush2.msra.mxu0 0.0
  %97 = vmatprep.subr.mxu0 0.0
  %98 = vmatpush2.msra.mxu0 0.0
  %99 = vmatprep.subr.mxu0 0.0
  %100 = vmatpush2.msra.mxu0 0.0
  %101 = vmatprep.subr.mxu0 0.0
  %102 = vmatpush2.msra.mxu0 0.0
  %103 = vmatprep.subr.mxu0 0.0
  %104 = vmatpush2.msra.mxu0 0.0
  %105 = vmatprep.mubr.f32.mxu0 0.0
  %106 = vmatmul.mubr.f32.gmra.mxu0 %v36
  %v107 = vpop.f32.mrf.mxu0
  %v108 = vadd.f32 0.0, %v107
  %v109 = vpop.f32.mrf.mxu0
  %110 = vmatprep.mubr.f32.mxu0 0.0
  %111 = vmatmul.mubr.f32.gmra.mxu0 %v39
  %v112 = vpop.f32.mrf.mxu0
  %v113 = vadd.f32 0.0, %v112
  %v114 = vpop.f32.mrf.mxu0
  %115 = vdwg.mxu0
  %v116 = vadd.f32 %v18, %v108
  %v117 = vadd.f32 %v19, %v113
  %vm118 = vcmask 130048
  %119 = vst.msk [vmem:[#allocation2] sm:$0xff] %vm118, %v116
  %120 = vst.msk [vmem:[#allocation2 + $0x8] sm:$0xff] %vm118, %v117
  // Predicated region
  $region14: #{myrgat_forward.31} parent=0 // pred_check
    %p121 = pneg %p11
  $region15: #{myrgat_forward.31} parent=0 // pred_check_branch
    %123 = sbr.rel (%p121) target = $region17
  $region16: #{myrgat_forward.31} parent=0 // pred_region
    %v124 = vld [vmem:[#allocation2] sm:$0xff]
    %v125 = vld [vmem:[#allocation2 + $0x8] sm:$0xff]
    %126 = vst.msk [vmem:[%s2] sm:$0xff] %vm118, %v124
    %127 = vst.msk [vmem:[%s2 + $0x8] sm:$0xff] %vm118, %v125
  $region17: #{myrgat_forward.31} parent=0 // pred_fallthru
    _
  // Predicated region
  $region18: #{myrgat_forward.31} parent=0 // pred_check
    _
  $region19: #{myrgat_forward.31} parent=0 // pred_check_branch
    %129 = sbr.rel (0) target = $region21
  $region20: #{myrgat_forward.31} parent=0 // pred_region
    _
  $region21: #{myrgat_forward.31} parent=0 // pred_fallthru
    _
  // Predicated region
  $region22: #{myrgat_forward.31} parent=0 // pred_check
    _
  $region23: #{myrgat_forward.31} parent=0 // pred_check_branch
    %131 = sbr.rel (0) target = $region25
  $region24: #{myrgat_forward.31} parent=0 // pred_region
    _
  $region25: #{myrgat_forward.31} parent=0 // pred_fallthru
    _

</llo_original>
